<compile_context>
chip_gen: v5e
topology: v5e:2x2
jax: 0.10.0
libtpu: 0.0.40
codegen_flags: <defaults>
</compile_context>

<pallas_src>
import jax
import jax.numpy as jnp
from jax import lax
from jax.experimental import pallas as pl
from jax.experimental.pallas import tpu as pltpu


def _sepconv_kernel(x_ref, wd_ref, wp_ref, b_ref, o_ref, xp_ref):
    # x_ref : (NB, Cin, H, W)  f32 VMEM  raw NCHW input block (no pre-padding)
    # wd_ref: (9 * Cin,)       f32 SMEM  depthwise weight * BN-depth scale, [(kh*3+kw)*Cin + c]
    # wp_ref: (Cin * Cout,)    f32 SMEM  pointwise weight * BN-point scale, [c*Cout + o]
    # b_ref : (Cout,)          f32 SMEM  fully folded bias
    # o_ref : (NB, Cout, H, W) f32 VMEM  output block (NCHW)
    # xp_ref: (Cin, H+2, W+2)  f32 VMEM  scratch; zero border = 3x3 conv zero padding
    NB, Cin, H, W = x_ref.shape
    Cout = o_ref.shape[1]

    # Zero the scratch every step so the border (= conv padding) is always valid
    # regardless of which TensorCore ran which grid step.  The interior is fully
    # overwritten below; the scratch is tiny, so this is a handful of vector stores.
    xp_ref[...] = jnp.zeros_like(xp_ref)

    for nb in range(NB):
        # relu_first=True: ReLU before the depthwise conv, written straight into the
        # padded scratch (zero padding commutes with ReLU).
        xp_ref[:, pl.ds(1, H), pl.ds(1, W)] = jnp.maximum(x_ref[nb], 0.0)

        # Per-output-channel f32 accumulators kept in vregs.
        z = [None] * Cout
        for c in range(Cin):
            # Depthwise 3x3 (stride 1, dilation 1): 9 Ref-sliced taps (static offset
            # loads from the padded scratch) x SMEM scalar weights on the VPU.
            y = None
            for kh in range(3):
                for kw in range(3):
                    tap = (xp_ref[c, pl.ds(kh, H), pl.ds(kw, W)]
                           * wd_ref[(kh * 3 + kw) * Cin + c])
                    y = tap if y is None else y + tap
            # Pointwise 1x1 conv with both BatchNorm affines folded in: Cout
            # broadcast-MACs on the VPU, all f32 (no MXU pass / bf16 downcast needed
            # at these channel counts).
            for o in range(Cout):
                t = y * wp_ref[c * Cout + o]
                z[o] = t if z[o] is None else z[o] + t

        for o in range(Cout):
            o_ref[nb, o] = z[o] + b_ref[o]


def _pick_images_per_step(n, cin, cout, h, w):
    """Images per grid step: grow per-step work with N, keep >= 2 grid steps when
    possible, and stay well under per-generation VMEM budgets (double-buffered)."""
    per_img_bytes = (cin + cout) * h * w * 4
    budget = 2 << 20  # ~2 MiB/stream -> a few MiB live with double buffering
    nb = 1
    for cand in range(1, n + 1):
        if n % cand != 0 or cand * per_img_bytes > budget:
            continue
        if n // cand >= 2 or n == 1:
            nb = cand
    return nb


def separable_conv2d(x, wd, wp, sd, bd, sp, bp):
    """SeparableConv2d forward (relu_first=True, stride=1, dilation=1, bias=False),
    inference-mode BatchNorm.  NCHW in / NCHW out (PyTorch layout, no transposes).

      x : (N, Cin, H, W) f32
      wd: (3, 3, Cin)    depthwise conv weight (PyTorch (Cin,1,3,3) -> (kh,kw,c))
      wp: (Cin, Cout)    pointwise conv weight (PyTorch (Cout,Cin,1,1) -> (c,o))
      sd, bd: (1, Cin)   BN_depth folded scale / bias
      sp, bp: (1, Cout)  BN_point folded scale / bias
    """
    N, Cin, H, W = x.shape
    Cout = wp.shape[1]

    # ---- Fold both BatchNorm affines into the conv weights (exact, free) ----
    #   z[o] = sum_c d[c] * (sd[c]*wp[c,o]*sp[o]) + (sum_c bd[c]*wp[c,o])*sp[o] + bp[o]
    # (bias computed with elementwise ops so it stays exactly f32).
    wd_f = (wd * sd[0]).reshape(-1)                                  # (9*Cin,)
    wp_f = (wp * sp[0][None, :]).reshape(-1)                         # (Cin*Cout,)
    b_f = jnp.sum(bd[0][:, None] * wp, axis=0) * sp[0] + bp[0]       # (Cout,)

    nb = _pick_images_per_step(N, Cin, Cout, H, W)
    grid = (N // nb,)

    # TODO(synk): for images too large for a whole-image block in VMEM, add a
    # row-tiled path with a manual halo DMA (memory_space=pl.ANY + make_async_copy);
    # whole-image blocks cover the shapes exercised here.
    # TODO(synk): for large Cin/Cout this should switch to an NHWC channel-matmul
    # (MXU) kernel; the unrolled per-channel VPU MACs target small channel counts.
    # TODO(synk): general stride/dilation and the relu_first=False branch are not
    # implemented (module defaults are covered).
    return pl.pallas_call(
        _sepconv_kernel,
        out_shape=jax.ShapeDtypeStruct((N, Cout, H, W), jnp.float32),
        grid_spec=pltpu.PrefetchScalarGridSpec(
            num_scalar_prefetch=0,
            grid=grid,
            in_specs=[
                pl.BlockSpec((nb, Cin, H, W), lambda i: (i, 0, 0, 0)),
                pl.BlockSpec(memory_space=pltpu.MemorySpace.SMEM),   # wd_f
                pl.BlockSpec(memory_space=pltpu.MemorySpace.SMEM),   # wp_f
                pl.BlockSpec(memory_space=pltpu.MemorySpace.SMEM),   # b_f
            ],
            out_specs=pl.BlockSpec((nb, Cout, H, W), lambda i: (i, 0, 0, 0)),
            scratch_shapes=[pltpu.VMEM((Cin, H + 2, W + 2), jnp.float32)],
        ),
        compiler_params=pltpu.CompilerParams(
            dimension_semantics=("parallel",)),
    )(x, wd_f, wp_f, b_f)


def _reference(x, wd, wp, sd, bd, sp, bp):
    """Pure-JAX reference (explicit taps, HIGHEST-precision pointwise, un-folded BN)."""
    N, Cin, H, W = x.shape
    xr = jnp.maximum(x, 0.0)
    xp = jnp.pad(xr, ((0, 0), (0, 0), (1, 1), (1, 1)))
    d = jnp.zeros_like(xr)
    for kh in range(3):
        for kw in range(3):
            d = d + xp[:, :, kh:kh + H, kw:kw + W] * wd[kh, kw][None, :, None, None]
    y = d * sd[0][None, :, None, None] + bd[0][None, :, None, None]
    z = jnp.einsum("nchw,co->nohw", y, wp, precision=lax.Precision.HIGHEST)
    z = z * sp[0][None, :, None, None] + bp[0][None, :, None, None]
    return z


if __name__ == "__main__":
    key = jax.random.PRNGKey(0)
    ks = jax.random.split(key, 10)

    N, Cin, Cout, H, W = 2, 4, 8, 16, 16

    x = jax.random.normal(ks[0], (N, Cin, H, W), dtype=jnp.float32)

    # Depthwise conv weight: PyTorch (Cin, 1, 3, 3) -> kernel layout (3, 3, Cin)
    wd = 0.2 * jax.random.normal(ks[1], (3, 3, Cin), dtype=jnp.float32)
    # Pointwise conv weight: PyTorch (Cout, Cin, 1, 1) -> (Cin, Cout)
    wp = 0.2 * jax.random.normal(ks[2], (Cin, Cout), dtype=jnp.float32)

    # BatchNorm (inference) parameters, folded to per-channel scale / bias.
    eps = 1e-5
    g_d = 1.0 + 0.1 * jax.random.normal(ks[3], (Cin,), dtype=jnp.float32)
    b_d = 0.1 * jax.random.normal(ks[4], (Cin,), dtype=jnp.float32)
    m_d = 0.1 * jax.random.normal(ks[5], (Cin,), dtype=jnp.float32)
    v_d = 1.0 + 0.1 * jax.random.uniform(ks[6], (Cin,), dtype=jnp.float32)
    sd = (g_d / jnp.sqrt(v_d + eps))[None, :]
    bd = (b_d - m_d * g_d / jnp.sqrt(v_d + eps))[None, :]

    g_p = 1.0 + 0.1 * jax.random.normal(ks[7], (Cout,), dtype=jnp.float32)
    b_p = 0.1 * jax.random.normal(ks[8], (Cout,), dtype=jnp.float32)
    m_p = 0.1 * jax.random.normal(ks[9], (Cout,), dtype=jnp.float32)
    v_p = 1.0 + 0.1 * jax.random.uniform(ks[6], (Cout,), dtype=jnp.float32)
    sp = (g_p / jnp.sqrt(v_p + eps))[None, :]
    bp = (b_p - m_p * g_p / jnp.sqrt(v_p + eps))[None, :]

    out = separable_conv2d(x, wd, wp, sd, bd, sp, bp)
    out = jax.block_until_ready(out)

    ref = _reference(x, wd, wp, sd, bd, sp, bp)
    assert out.shape == (N, Cout, H, W)
    # All-f32 arithmetic (no bf16 downcast anymore) -> tight tolerance.
    assert jnp.allclose(out, ref, atol=1e-4, rtol=1e-4), "mismatch vs reference"

    print("KERNEL_OK")
</pallas_src>

<mosaic_0001>
module attributes {stable_mosaic.version = 11 : i64} {
  func.func @_sepconv_kernel(%arg0: i32, %arg1: memref<1x4x16x16xf32, #tpu.memory_space<vmem>>, %arg2: memref<36xf32, #tpu.memory_space<smem>>, %arg3: memref<32xf32, #tpu.memory_space<smem>>, %arg4: memref<8xf32, #tpu.memory_space<smem>>, %arg5: memref<1x8x16x16xf32, #tpu.memory_space<vmem>>, %arg6: memref<4x18x18xf32, #tpu.memory_space<vmem>>) attributes {dimension_semantics = [#tpu.dimension_semantics<parallel>], iteration_bounds = array<i64: 2>, scalar_prefetch = 0 : i64, scratch_operands = 1 : i64, tpu.core_type = #tpu.core_type<tc>, window_params = [{transform_indices = @transform_0, window_bounds = array<i64: 1, 4, 16, 16>}, {transform_indices = @transform_1, window_bounds = array<i64: 36>}, {transform_indices = @transform_2, window_bounds = array<i64: 32>}, {transform_indices = @transform_3, window_bounds = array<i64: 8>}, {transform_indices = @transform_4, window_bounds = array<i64: 1, 8, 16, 16>}]} {
    %cst = arith.constant 0.000000e+00 : f32
    %0 = vector.broadcast %cst : f32 to vector<4x18x18xf32>
    %c0 = arith.constant 0 : index
    %c0_0 = arith.constant 0 : index
    %c0_1 = arith.constant 0 : index
    %1 = vector.load %arg6[%c0, %c0_0, %c0_1] : memref<4x18x18xf32, #tpu.memory_space<vmem>>, vector<4x18x18xf32>
    tpu.vector_store %arg6[%c0, %c0_0, %c0_1], %0 {strides = array<i32>} : memref<4x18x18xf32, #tpu.memory_space<vmem>>, vector<4x18x18xf32>,
    %c0_2 = arith.constant 0 : index
    %c0_3 = arith.constant 0 : index
    %c0_4 = arith.constant 0 : index
    %c0_5 = arith.constant 0 : index
    %2 = vector.load %arg1[%c0_2, %c0_3, %c0_4, %c0_5] : memref<1x4x16x16xf32, #tpu.memory_space<vmem>>, vector<1x4x16x16xf32>
    %3 = vector.shape_cast %2 : vector<1x4x16x16xf32> to vector<4x16x16xf32>
    %cst_6 = arith.constant 0.000000e+00 : f32
    %4 = vector.broadcast %cst_6 : f32 to vector<4x16x16xf32>
    %5 = arith.maximumf %3, %4 : vector<4x16x16xf32>
    %c0_7 = arith.constant 0 : index
    %c1 = arith.constant 1 : index
    %c1_8 = arith.constant 1 : index
    %6 = vector.load %arg6[%c0_7, %c1, %c1_8] : memref<4x18x18xf32, #tpu.memory_space<vmem>>, vector<4x16x16xf32>
    tpu.vector_store %arg6[%c0_7, %c1, %c1_8], %5 {strides = array<i32>} : memref<4x18x18xf32, #tpu.memory_space<vmem>>, vector<4x16x16xf32>,
    %c0_9 = arith.constant 0 : index
    %c0_10 = arith.constant 0 : index
    %c0_11 = arith.constant 0 : index
    %7 = vector.load %arg6[%c0_9, %c0_10, %c0_11] : memref<4x18x18xf32, #tpu.memory_space<vmem>>, vector<1x16x16xf32>
    %8 = vector.shape_cast %7 : vector<1x16x16xf32> to vector<16x16xf32>
    %c0_12 = arith.constant 0 : index
    %9 = memref.load %arg2[%c0_12] : memref<36xf32, #tpu.memory_space<smem>>
    %10 = vector.broadcast %9 : f32 to vector<16x16xf32>
    %11 = arith.mulf %8, %10 : vector<16x16xf32>
    %c0_13 = arith.constant 0 : index
    %c0_14 = arith.constant 0 : index
    %c1_15 = arith.constant 1 : index
    %12 = vector.load %arg6[%c0_13, %c0_14, %c1_15] : memref<4x18x18xf32, #tpu.memory_space<vmem>>, vector<1x16x16xf32>
    %13 = vector.shape_cast %12 : vector<1x16x16xf32> to vector<16x16xf32>
    %c4 = arith.constant 4 : index
    %14 = memref.load %arg2[%c4] : memref<36xf32, #tpu.memory_space<smem>>
    %15 = vector.broadcast %14 : f32 to vector<16x16xf32>
    %16 = arith.mulf %13, %15 : vector<16x16xf32>
    %17 = arith.addf %11, %16 : vector<16x16xf32>
    %c0_16 = arith.constant 0 : index
    %c0_17 = arith.constant 0 : index
    %c2 = arith.constant 2 : index
    %18 = vector.load %arg6[%c0_16, %c0_17, %c2] : memref<4x18x18xf32, #tpu.memory_space<vmem>>, vector<1x16x16xf32>
    %19 = vector.shape_cast %18 : vector<1x16x16xf32> to vector<16x16xf32>
    %c8 = arith.constant 8 : index
    %20 = memref.load %arg2[%c8] : memref<36xf32, #tpu.memory_space<smem>>
    %21 = vector.broadcast %20 : f32 to vector<16x16xf32>
    %22 = arith.mulf %19, %21 : vector<16x16xf32>
    %23 = arith.addf %17, %22 : vector<16x16xf32>
    %c0_18 = arith.constant 0 : index
    %c1_19 = arith.constant 1 : index
    %c0_20 = arith.constant 0 : index
    %24 = vector.load %arg6[%c0_18, %c1_19, %c0_20] : memref<4x18x18xf32, #tpu.memory_space<vmem>>, vector<1x16x16xf32>
    %25 = vector.shape_cast %24 : vector<1x16x16xf32> to vector<16x16xf32>
    %c12 = arith.constant 12 : index
    %26 = memref.load %arg2[%c12] : memref<36xf32, #tpu.memory_space<smem>>
    %27 = vector.broadcast %26 : f32 to vector<16x16xf32>
    %28 = arith.mulf %25, %27 : vector<16x16xf32>
    %29 = arith.addf %23, %28 : vector<16x16xf32>
    %c0_21 = arith.constant 0 : index
    %c1_22 = arith.constant 1 : index
    %c1_23 = arith.constant 1 : index
    %30 = vector.load %arg6[%c0_21, %c1_22, %c1_23] : memref<4x18x18xf32, #tpu.memory_space<vmem>>, vector<1x16x16xf32>
    %31 = vector.shape_cast %30 : vector<1x16x16xf32> to vector<16x16xf32>
    %c16 = arith.constant 16 : index
    %32 = memref.load %arg2[%c16] : memref<36xf32, #tpu.memory_space<smem>>
    %33 = vector.broadcast %32 : f32 to vector<16x16xf32>
    %34 = arith.mulf %31, %33 : vector<16x16xf32>
    %35 = arith.addf %29, %34 : vector<16x16xf32>
    %c0_24 = arith.constant 0 : index
    %c1_25 = arith.constant 1 : index
    %c2_26 = arith.constant 2 : index
    %36 = vector.load %arg6[%c0_24, %c1_25, %c2_26] : memref<4x18x18xf32, #tpu.memory_space<vmem>>, vector<1x16x16xf32>
    %37 = vector.shape_cast %36 : vector<1x16x16xf32> to vector<16x16xf32>
    %c20 = arith.constant 20 : index
    %38 = memref.load %arg2[%c20] : memref<36xf32, #tpu.memory_space<smem>>
    %39 = vector.broadcast %38 : f32 to vector<16x16xf32>
    %40 = arith.mulf %37, %39 : vector<16x16xf32>
    %41 = arith.addf %35, %40 : vector<16x16xf32>
    %c0_27 = arith.constant 0 : index
    %c2_28 = arith.constant 2 : index
    %c0_29 = arith.constant 0 : index
    %42 = vector.load %arg6[%c0_27, %c2_28, %c0_29] : memref<4x18x18xf32, #tpu.memory_space<vmem>>, vector<1x16x16xf32>
    %43 = vector.shape_cast %42 : vector<1x16x16xf32> to vector<16x16xf32>
    %c24 = arith.constant 24 : index
    %44 = memref.load %arg2[%c24] : memref<36xf32, #tpu.memory_space<smem>>
    %45 = vector.broadcast %44 : f32 to vector<16x16xf32>
    %46 = arith.mulf %43, %45 : vector<16x16xf32>
    %47 = arith.addf %41, %46 : vector<16x16xf32>
    %c0_30 = arith.constant 0 : index
    %c2_31 = arith.constant 2 : index
    %c1_32 = arith.constant 1 : index
    %48 = vector.load %arg6[%c0_30, %c2_31, %c1_32] : memref<4x18x18xf32, #tpu.memory_space<vmem>>, vector<1x16x16xf32>
    %49 = vector.shape_cast %48 : vector<1x16x16xf32> to vector<16x16xf32>
    %c28 = arith.constant 28 : index
    %50 = memref.load %arg2[%c28] : memref<36xf32, #tpu.memory_space<smem>>
    %51 = vector.broadcast %50 : f32 to vector<16x16xf32>
    %52 = arith.mulf %49, %51 : vector<16x16xf32>
    %53 = arith.addf %47, %52 : vector<16x16xf32>
    %c0_33 = arith.constant 0 : index
    %c2_34 = arith.constant 2 : index
    %c2_35 = arith.constant 2 : index
    %54 = vector.load %arg6[%c0_33, %c2_34, %c2_35] : memref<4x18x18xf32, #tpu.memory_space<vmem>>, vector<1x16x16xf32>
    %55 = vector.shape_cast %54 : vector<1x16x16xf32> to vector<16x16xf32>
    %c32 = arith.constant 32 : index
    %56 = memref.load %arg2[%c32] : memref<36xf32, #tpu.memory_space<smem>>
    %57 = vector.broadcast %56 : f32 to vector<16x16xf32>
    %58 = arith.mulf %55, %57 : vector<16x16xf32>
    %59 = arith.addf %53, %58 : vector<16x16xf32>
    %c0_36 = arith.constant 0 : index
    %60 = memref.load %arg3[%c0_36] : memref<32xf32, #tpu.memory_space<smem>>
    %61 = vector.broadcast %60 : f32 to vector<16x16xf32>
    %62 = arith.mulf %59, %61 : vector<16x16xf32>
    %c1_37 = arith.constant 1 : index
    %63 = memref.load %arg3[%c1_37] : memref<32xf32, #tpu.memory_space<smem>>
    %64 = vector.broadcast %63 : f32 to vector<16x16xf32>
    %65 = arith.mulf %59, %64 : vector<16x16xf32>
    %c2_38 = arith.constant 2 : index
    %66 = memref.load %arg3[%c2_38] : memref<32xf32, #tpu.memory_space<smem>>
    %67 = vector.broadcast %66 : f32 to vector<16x16xf32>
    %68 = arith.mulf %59, %67 : vector<16x16xf32>
    %c3 = arith.constant 3 : index
    %69 = memref.load %arg3[%c3] : memref<32xf32, #tpu.memory_space<smem>>
    %70 = vector.broadcast %69 : f32 to vector<16x16xf32>
    %71 = arith.mulf %59, %70 : vector<16x16xf32>
    %c4_39 = arith.constant 4 : index
    %72 = memref.load %arg3[%c4_39] : memref<32xf32, #tpu.memory_space<smem>>
    %73 = vector.broadcast %72 : f32 to vector<16x16xf32>
    %74 = arith.mulf %59, %73 : vector<16x16xf32>
    %c5 = arith.constant 5 : index
    %75 = memref.load %arg3[%c5] : memref<32xf32, #tpu.memory_space<smem>>
    %76 = vector.broadcast %75 : f32 to vector<16x16xf32>
    %77 = arith.mulf %59, %76 : vector<16x16xf32>
    %c6 = arith.constant 6 : index
    %78 = memref.load %arg3[%c6] : memref<32xf32, #tpu.memory_space<smem>>
    %79 = vector.broadcast %78 : f32 to vector<16x16xf32>
    %80 = arith.mulf %59, %79 : vector<16x16xf32>
    %c7 = arith.constant 7 : index
    %81 = memref.load %arg3[%c7] : memref<32xf32, #tpu.memory_space<smem>>
    %82 = vector.broadcast %81 : f32 to vector<16x16xf32>
    %83 = arith.mulf %59, %82 : vector<16x16xf32>
    %c1_40 = arith.constant 1 : index
    %c0_41 = arith.constant 0 : index
    %c0_42 = arith.constant 0 : index
    %84 = vector.load %arg6[%c1_40, %c0_41, %c0_42] : memref<4x18x18xf32, #tpu.memory_space<vmem>>, vector<1x16x16xf32>
    %85 = vector.shape_cast %84 : vector<1x16x16xf32> to vector<16x16xf32>
    %c1_43 = arith.constant 1 : index
    %86 = memref.load %arg2[%c1_43] : memref<36xf32, #tpu.memory_space<smem>>
    %87 = vector.broadcast %86 : f32 to vector<16x16xf32>
    %88 = arith.mulf %85, %87 : vector<16x16xf32>
    %c1_44 = arith.constant 1 : index
    %c0_45 = arith.constant 0 : index
    %c1_46 = arith.constant 1 : index
    %89 = vector.load %arg6[%c1_44, %c0_45, %c1_46] : memref<4x18x18xf32, #tpu.memory_space<vmem>>, vector<1x16x16xf32>
    %90 = vector.shape_cast %89 : vector<1x16x16xf32> to vector<16x16xf32>
    %c5_47 = arith.constant 5 : index
    %91 = memref.load %arg2[%c5_47] : memref<36xf32, #tpu.memory_space<smem>>
    %92 = vector.broadcast %91 : f32 to vector<16x16xf32>
    %93 = arith.mulf %90, %92 : vector<16x16xf32>
    %94 = arith.addf %88, %93 : vector<16x16xf32>
    %c1_48 = arith.constant 1 : index
    %c0_49 = arith.constant 0 : index
    %c2_50 = arith.constant 2 : index
    %95 = vector.load %arg6[%c1_48, %c0_49, %c2_50] : memref<4x18x18xf32, #tpu.memory_space<vmem>>, vector<1x16x16xf32>
    %96 = vector.shape_cast %95 : vector<1x16x16xf32> to vector<16x16xf32>
    %c9 = arith.constant 9 : index
    %97 = memref.load %arg2[%c9] : memref<36xf32, #tpu.memory_space<smem>>
    %98 = vector.broadcast %97 : f32 to vector<16x16xf32>
    %99 = arith.mulf %96, %98 : vector<16x16xf32>
    %100 = arith.addf %94, %99 : vector<16x16xf32>
    %c1_51 = arith.constant 1 : index
    %c1_52 = arith.constant 1 : index
    %c0_53 = arith.constant 0 : index
    %101 = vector.load %arg6[%c1_51, %c1_52, %c0_53] : memref<4x18x18xf32, #tpu.memory_space<vmem>>, vector<1x16x16xf32>
    %102 = vector.shape_cast %101 : vector<1x16x16xf32> to vector<16x16xf32>
    %c13 = arith.constant 13 : index
    %103 = memref.load %arg2[%c13] : memref<36xf32, #tpu.memory_space<smem>>
    %104 = vector.broadcast %103 : f32 to vector<16x16xf32>
    %105 = arith.mulf %102, %104 : vector<16x16xf32>
    %106 = arith.addf %100, %105 : vector<16x16xf32>
    %c1_54 = arith.constant 1 : index
    %c1_55 = arith.constant 1 : index
    %c1_56 = arith.constant 1 : index
    %107 = vector.load %arg6[%c1_54, %c1_55, %c1_56] : memref<4x18x18xf32, #tpu.memory_space<vmem>>, vector<1x16x16xf32>
    %108 = vector.shape_cast %107 : vector<1x16x16xf32> to vector<16x16xf32>
    %c17 = arith.constant 17 : index
    %109 = memref.load %arg2[%c17] : memref<36xf32, #tpu.memory_space<smem>>
    %110 = vector.broadcast %109 : f32 to vector<16x16xf32>
    %111 = arith.mulf %108, %110 : vector<16x16xf32>
    %112 = arith.addf %106, %111 : vector<16x16xf32>
    %c1_57 = arith.constant 1 : index
    %c1_58 = arith.constant 1 : index
    %c2_59 = arith.constant 2 : index
    %113 = vector.load %arg6[%c1_57, %c1_58, %c2_59] : memref<4x18x18xf32, #tpu.memory_space<vmem>>, vector<1x16x16xf32>
    %114 = vector.shape_cast %113 : vector<1x16x16xf32> to vector<16x16xf32>
    %c21 = arith.constant 21 : index
    %115 = memref.load %arg2[%c21] : memref<36xf32, #tpu.memory_space<smem>>
    %116 = vector.broadcast %115 : f32 to vector<16x16xf32>
    %117 = arith.mulf %114, %116 : vector<16x16xf32>
    %118 = arith.addf %112, %117 : vector<16x16xf32>
    %c1_60 = arith.constant 1 : index
    %c2_61 = arith.constant 2 : index
    %c0_62 = arith.constant 0 : index
    %119 = vector.load %arg6[%c1_60, %c2_61, %c0_62] : memref<4x18x18xf32, #tpu.memory_space<vmem>>, vector<1x16x16xf32>
    %120 = vector.shape_cast %119 : vector<1x16x16xf32> to vector<16x16xf32>
    %c25 = arith.constant 25 : index
    %121 = memref.load %arg2[%c25] : memref<36xf32, #tpu.memory_space<smem>>
    %122 = vector.broadcast %121 : f32 to vector<16x16xf32>
    %123 = arith.mulf %120, %122 : vector<16x16xf32>
    %124 = arith.addf %118, %123 : vector<16x16xf32>
    %c1_63 = arith.constant 1 : index
    %c2_64 = arith.constant 2 : index
    %c1_65 = arith.constant 1 : index
    %125 = vector.load %arg6[%c1_63, %c2_64, %c1_65] : memref<4x18x18xf32, #tpu.memory_space<vmem>>, vector<1x16x16xf32>
    %126 = vector.shape_cast %125 : vector<1x16x16xf32> to vector<16x16xf32>
    %c29 = arith.constant 29 : index
    %127 = memref.load %arg2[%c29] : memref<36xf32, #tpu.memory_space<smem>>
    %128 = vector.broadcast %127 : f32 to vector<16x16xf32>
    %129 = arith.mulf %126, %128 : vector<16x16xf32>
    %130 = arith.addf %124, %129 : vector<16x16xf32>
    %c1_66 = arith.constant 1 : index
    %c2_67 = arith.constant 2 : index
    %c2_68 = arith.constant 2 : index
    %131 = vector.load %arg6[%c1_66, %c2_67, %c2_68] : memref<4x18x18xf32, #tpu.memory_space<vmem>>, vector<1x16x16xf32>
    %132 = vector.shape_cast %131 : vector<1x16x16xf32> to vector<16x16xf32>
    %c33 = arith.constant 33 : index
    %133 = memref.load %arg2[%c33] : memref<36xf32, #tpu.memory_space<smem>>
    %134 = vector.broadcast %133 : f32 to vector<16x16xf32>
    %135 = arith.mulf %132, %134 : vector<16x16xf32>
    %136 = arith.addf %130, %135 : vector<16x16xf32>
    %c8_69 = arith.constant 8 : index
    %137 = memref.load %arg3[%c8_69] : memref<32xf32, #tpu.memory_space<smem>>
    %138 = vector.broadcast %137 : f32 to vector<16x16xf32>
    %139 = arith.mulf %136, %138 : vector<16x16xf32>
    %140 = arith.addf %62, %139 : vector<16x16xf32>
    %c9_70 = arith.constant 9 : index
    %141 = memref.load %arg3[%c9_70] : memref<32xf32, #tpu.memory_space<smem>>
    %142 = vector.broadcast %141 : f32 to vector<16x16xf32>
    %143 = arith.mulf %136, %142 : vector<16x16xf32>
    %144 = arith.addf %65, %143 : vector<16x16xf32>
    %c10 = arith.constant 10 : index
    %145 = memref.load %arg3[%c10] : memref<32xf32, #tpu.memory_space<smem>>
    %146 = vector.broadcast %145 : f32 to vector<16x16xf32>
    %147 = arith.mulf %136, %146 : vector<16x16xf32>
    %148 = arith.addf %68, %147 : vector<16x16xf32>
    %c11 = arith.constant 11 : index
    %149 = memref.load %arg3[%c11] : memref<32xf32, #tpu.memory_space<smem>>
    %150 = vector.broadcast %149 : f32 to vector<16x16xf32>
    %151 = arith.mulf %136, %150 : vector<16x16xf32>
    %152 = arith.addf %71, %151 : vector<16x16xf32>
    %c12_71 = arith.constant 12 : index
    %153 = memref.load %arg3[%c12_71] : memref<32xf32, #tpu.memory_space<smem>>
    %154 = vector.broadcast %153 : f32 to vector<16x16xf32>
    %155 = arith.mulf %136, %154 : vector<16x16xf32>
    %156 = arith.addf %74, %155 : vector<16x16xf32>
    %c13_72 = arith.constant 13 : index
    %157 = memref.load %arg3[%c13_72] : memref<32xf32, #tpu.memory_space<smem>>
    %158 = vector.broadcast %157 : f32 to vector<16x16xf32>
    %159 = arith.mulf %136, %158 : vector<16x16xf32>
    %160 = arith.addf %77, %159 : vector<16x16xf32>
    %c14 = arith.constant 14 : index
    %161 = memref.load %arg3[%c14] : memref<32xf32, #tpu.memory_space<smem>>
    %162 = vector.broadcast %161 : f32 to vector<16x16xf32>
    %163 = arith.mulf %136, %162 : vector<16x16xf32>
    %164 = arith.addf %80, %163 : vector<16x16xf32>
    %c15 = arith.constant 15 : index
    %165 = memref.load %arg3[%c15] : memref<32xf32, #tpu.memory_space<smem>>
    %166 = vector.broadcast %165 : f32 to vector<16x16xf32>
    %167 = arith.mulf %136, %166 : vector<16x16xf32>
    %168 = arith.addf %83, %167 : vector<16x16xf32>
    %c2_73 = arith.constant 2 : index
    %c0_74 = arith.constant 0 : index
    %c0_75 = arith.constant 0 : index
    %169 = vector.load %arg6[%c2_73, %c0_74, %c0_75] : memref<4x18x18xf32, #tpu.memory_space<vmem>>, vector<1x16x16xf32>
    %170 = vector.shape_cast %169 : vector<1x16x16xf32> to vector<16x16xf32>
    %c2_76 = arith.constant 2 : index
    %171 = memref.load %arg2[%c2_76] : memref<36xf32, #tpu.memory_space<smem>>
    %172 = vector.broadcast %171 : f32 to vector<16x16xf32>
    %173 = arith.mulf %170, %172 : vector<16x16xf32>
    %c2_77 = arith.constant 2 : index
    %c0_78 = arith.constant 0 : index
    %c1_79 = arith.constant 1 : index
    %174 = vector.load %arg6[%c2_77, %c0_78, %c1_79] : memref<4x18x18xf32, #tpu.memory_space<vmem>>, vector<1x16x16xf32>
    %175 = vector.shape_cast %174 : vector<1x16x16xf32> to vector<16x16xf32>
    %c6_80 = arith.constant 6 : index
    %176 = memref.load %arg2[%c6_80] : memref<36xf32, #tpu.memory_space<smem>>
    %177 = vector.broadcast %176 : f32 to vector<16x16xf32>
    %178 = arith.mulf %175, %177 : vector<16x16xf32>
    %179 = arith.addf %173, %178 : vector<16x16xf32>
    %c2_81 = arith.constant 2 : index
    %c0_82 = arith.constant 0 : index
    %c2_83 = arith.constant 2 : index
    %180 = vector.load %arg6[%c2_81, %c0_82, %c2_83] : memref<4x18x18xf32, #tpu.memory_space<vmem>>, vector<1x16x16xf32>
    %181 = vector.shape_cast %180 : vector<1x16x16xf32> to vector<16x16xf32>
    %c10_84 = arith.constant 10 : index
    %182 = memref.load %arg2[%c10_84] : memref<36xf32, #tpu.memory_space<smem>>
    %183 = vector.broadcast %182 : f32 to vector<16x16xf32>
    %184 = arith.mulf %181, %183 : vector<16x16xf32>
    %185 = arith.addf %179, %184 : vector<16x16xf32>
    %c2_85 = arith.constant 2 : index
    %c1_86 = arith.constant 1 : index
    %c0_87 = arith.constant 0 : index
    %186 = vector.load %arg6[%c2_85, %c1_86, %c0_87] : memref<4x18x18xf32, #tpu.memory_space<vmem>>, vector<1x16x16xf32>
    %187 = vector.shape_cast %186 : vector<1x16x16xf32> to vector<16x16xf32>
    %c14_88 = arith.constant 14 : index
    %188 = memref.load %arg2[%c14_88] : memref<36xf32, #tpu.memory_space<smem>>
    %189 = vector.broadcast %188 : f32 to vector<16x16xf32>
    %190 = arith.mulf %187, %189 : vector<16x16xf32>
    %191 = arith.addf %185, %190 : vector<16x16xf32>
    %c2_89 = arith.constant 2 : index
    %c1_90 = arith.constant 1 : index
    %c1_91 = arith.constant 1 : index
    %192 = vector.load %arg6[%c2_89, %c1_90, %c1_91] : memref<4x18x18xf32, #tpu.memory_space<vmem>>, vector<1x16x16xf32>
    %193 = vector.shape_cast %192 : vector<1x16x16xf32> to vector<16x16xf32>
    %c18 = arith.constant 18 : index
    %194 = memref.load %arg2[%c18] : memref<36xf32, #tpu.memory_space<smem>>
    %195 = vector.broadcast %194 : f32 to vector<16x16xf32>
    %196 = arith.mulf %193, %195 : vector<16x16xf32>
    %197 = arith.addf %191, %196 : vector<16x16xf32>
    %c2_92 = arith.constant 2 : index
    %c1_93 = arith.constant 1 : index
    %c2_94 = arith.constant 2 : index
    %198 = vector.load %arg6[%c2_92, %c1_93, %c2_94] : memref<4x18x18xf32, #tpu.memory_space<vmem>>, vector<1x16x16xf32>
    %199 = vector.shape_cast %198 : vector<1x16x16xf32> to vector<16x16xf32>
    %c22 = arith.constant 22 : index
    %200 = memref.load %arg2[%c22] : memref<36xf32, #tpu.memory_space<smem>>
    %201 = vector.broadcast %200 : f32 to vector<16x16xf32>
    %202 = arith.mulf %199, %201 : vector<16x16xf32>
    %203 = arith.addf %197, %202 : vector<16x16xf32>
    %c2_95 = arith.constant 2 : index
    %c2_96 = arith.constant 2 : index
    %c0_97 = arith.constant 0 : index
    %204 = vector.load %arg6[%c2_95, %c2_96, %c0_97] : memref<4x18x18xf32, #tpu.memory_space<vmem>>, vector<1x16x16xf32>
    %205 = vector.shape_cast %204 : vector<1x16x16xf32> to vector<16x16xf32>
    %c26 = arith.constant 26 : index
    %206 = memref.load %arg2[%c26] : memref<36xf32, #tpu.memory_space<smem>>
    %207 = vector.broadcast %206 : f32 to vector<16x16xf32>
    %208 = arith.mulf %205, %207 : vector<16x16xf32>
    %209 = arith.addf %203, %208 : vector<16x16xf32>
    %c2_98 = arith.constant 2 : index
    %c2_99 = arith.constant 2 : index
    %c1_100 = arith.constant 1 : index
    %210 = vector.load %arg6[%c2_98, %c2_99, %c1_100] : memref<4x18x18xf32, #tpu.memory_space<vmem>>, vector<1x16x16xf32>
    %211 = vector.shape_cast %210 : vector<1x16x16xf32> to vector<16x16xf32>
    %c30 = arith.constant 30 : index
    %212 = memref.load %arg2[%c30] : memref<36xf32, #tpu.memory_space<smem>>
    %213 = vector.broadcast %212 : f32 to vector<16x16xf32>
    %214 = arith.mulf %211, %213 : vector<16x16xf32>
    %215 = arith.addf %209, %214 : vector<16x16xf32>
    %c2_101 = arith.constant 2 : index
    %c2_102 = arith.constant 2 : index
    %c2_103 = arith.constant 2 : index
    %216 = vector.load %arg6[%c2_101, %c2_102, %c2_103] : memref<4x18x18xf32, #tpu.memory_space<vmem>>, vector<1x16x16xf32>
    %217 = vector.shape_cast %216 : vector<1x16x16xf32> to vector<16x16xf32>
    %c34 = arith.constant 34 : index
    %218 = memref.load %arg2[%c34] : memref<36xf32, #tpu.memory_space<smem>>
    %219 = vector.broadcast %218 : f32 to vector<16x16xf32>
    %220 = arith.mulf %217, %219 : vector<16x16xf32>
    %221 = arith.addf %215, %220 : vector<16x16xf32>
    %c16_104 = arith.constant 16 : index
    %222 = memref.load %arg3[%c16_104] : memref<32xf32, #tpu.memory_space<smem>>
    %223 = vector.broadcast %222 : f32 to vector<16x16xf32>
    %224 = arith.mulf %221, %223 : vector<16x16xf32>
    %225 = arith.addf %140, %224 : vector<16x16xf32>
    %c17_105 = arith.constant 17 : index
    %226 = memref.load %arg3[%c17_105] : memref<32xf32, #tpu.memory_space<smem>>
    %227 = vector.broadcast %226 : f32 to vector<16x16xf32>
    %228 = arith.mulf %221, %227 : vector<16x16xf32>
    %229 = arith.addf %144, %228 : vector<16x16xf32>
    %c18_106 = arith.constant 18 : index
    %230 = memref.load %arg3[%c18_106] : memref<32xf32, #tpu.memory_space<smem>>
    %231 = vector.broadcast %230 : f32 to vector<16x16xf32>
    %232 = arith.mulf %221, %231 : vector<16x16xf32>
    %233 = arith.addf %148, %232 : vector<16x16xf32>
    %c19 = arith.constant 19 : index
    %234 = memref.load %arg3[%c19] : memref<32xf32, #tpu.memory_space<smem>>
    %235 = vector.broadcast %234 : f32 to vector<16x16xf32>
    %236 = arith.mulf %221, %235 : vector<16x16xf32>
    %237 = arith.addf %152, %236 : vector<16x16xf32>
    %c20_107 = arith.constant 20 : index
    %238 = memref.load %arg3[%c20_107] : memref<32xf32, #tpu.memory_space<smem>>
    %239 = vector.broadcast %238 : f32 to vector<16x16xf32>
    %240 = arith.mulf %221, %239 : vector<16x16xf32>
    %241 = arith.addf %156, %240 : vector<16x16xf32>
    %c21_108 = arith.constant 21 : index
    %242 = memref.load %arg3[%c21_108] : memref<32xf32, #tpu.memory_space<smem>>
    %243 = vector.broadcast %242 : f32 to vector<16x16xf32>
    %244 = arith.mulf %221, %243 : vector<16x16xf32>
    %245 = arith.addf %160, %244 : vector<16x16xf32>
    %c22_109 = arith.constant 22 : index
    %246 = memref.load %arg3[%c22_109] : memref<32xf32, #tpu.memory_space<smem>>
    %247 = vector.broadcast %246 : f32 to vector<16x16xf32>
    %248 = arith.mulf %221, %247 : vector<16x16xf32>
    %249 = arith.addf %164, %248 : vector<16x16xf32>
    %c23 = arith.constant 23 : index
    %250 = memref.load %arg3[%c23] : memref<32xf32, #tpu.memory_space<smem>>
    %251 = vector.broadcast %250 : f32 to vector<16x16xf32>
    %252 = arith.mulf %221, %251 : vector<16x16xf32>
    %253 = arith.addf %168, %252 : vector<16x16xf32>
    %c3_110 = arith.constant 3 : index
    %c0_111 = arith.constant 0 : index
    %c0_112 = arith.constant 0 : index
    %254 = vector.load %arg6[%c3_110, %c0_111, %c0_112] : memref<4x18x18xf32, #tpu.memory_space<vmem>>, vector<1x16x16xf32>
    %255 = vector.shape_cast %254 : vector<1x16x16xf32> to vector<16x16xf32>
    %c3_113 = arith.constant 3 : index
    %256 = memref.load %arg2[%c3_113] : memref<36xf32, #tpu.memory_space<smem>>
    %257 = vector.broadcast %256 : f32 to vector<16x16xf32>
    %258 = arith.mulf %255, %257 : vector<16x16xf32>
    %c3_114 = arith.constant 3 : index
    %c0_115 = arith.constant 0 : index
    %c1_116 = arith.constant 1 : index
    %259 = vector.load %arg6[%c3_114, %c0_115, %c1_116] : memref<4x18x18xf32, #tpu.memory_space<vmem>>, vector<1x16x16xf32>
    %260 = vector.shape_cast %259 : vector<1x16x16xf32> to vector<16x16xf32>
    %c7_117 = arith.constant 7 : index
    %261 = memref.load %arg2[%c7_117] : memref<36xf32, #tpu.memory_space<smem>>
    %262 = vector.broadcast %261 : f32 to vector<16x16xf32>
    %263 = arith.mulf %260, %262 : vector<16x16xf32>
    %264 = arith.addf %258, %263 : vector<16x16xf32>
    %c3_118 = arith.constant 3 : index
    %c0_119 = arith.constant 0 : index
    %c2_120 = arith.constant 2 : index
    %265 = vector.load %arg6[%c3_118, %c0_119, %c2_120] : memref<4x18x18xf32, #tpu.memory_space<vmem>>, vector<1x16x16xf32>
    %266 = vector.shape_cast %265 : vector<1x16x16xf32> to vector<16x16xf32>
    %c11_121 = arith.constant 11 : index
    %267 = memref.load %arg2[%c11_121] : memref<36xf32, #tpu.memory_space<smem>>
    %268 = vector.broadcast %267 : f32 to vector<16x16xf32>
    %269 = arith.mulf %266, %268 : vector<16x16xf32>
    %270 = arith.addf %264, %269 : vector<16x16xf32>
    %c3_122 = arith.constant 3 : index
    %c1_123 = arith.constant 1 : index
    %c0_124 = arith.constant 0 : index
    %271 = vector.load %arg6[%c3_122, %c1_123, %c0_124] : memref<4x18x18xf32, #tpu.memory_space<vmem>>, vector<1x16x16xf32>
    %272 = vector.shape_cast %271 : vector<1x16x16xf32> to vector<16x16xf32>
    %c15_125 = arith.constant 15 : index
    %273 = memref.load %arg2[%c15_125] : memref<36xf32, #tpu.memory_space<smem>>
    %274 = vector.broadcast %273 : f32 to vector<16x16xf32>
    %275 = arith.mulf %272, %274 : vector<16x16xf32>
    %276 = arith.addf %270, %275 : vector<16x16xf32>
    %c3_126 = arith.constant 3 : index
    %c1_127 = arith.constant 1 : index
    %c1_128 = arith.constant 1 : index
    %277 = vector.load %arg6[%c3_126, %c1_127, %c1_128] : memref<4x18x18xf32, #tpu.memory_space<vmem>>, vector<1x16x16xf32>
    %278 = vector.shape_cast %277 : vector<1x16x16xf32> to vector<16x16xf32>
    %c19_129 = arith.constant 19 : index
    %279 = memref.load %arg2[%c19_129] : memref<36xf32, #tpu.memory_space<smem>>
    %280 = vector.broadcast %279 : f32 to vector<16x16xf32>
    %281 = arith.mulf %278, %280 : vector<16x16xf32>
    %282 = arith.addf %276, %281 : vector<16x16xf32>
    %c3_130 = arith.constant 3 : index
    %c1_131 = arith.constant 1 : index
    %c2_132 = arith.constant 2 : index
    %283 = vector.load %arg6[%c3_130, %c1_131, %c2_132] : memref<4x18x18xf32, #tpu.memory_space<vmem>>, vector<1x16x16xf32>
    %284 = vector.shape_cast %283 : vector<1x16x16xf32> to vector<16x16xf32>
    %c23_133 = arith.constant 23 : index
    %285 = memref.load %arg2[%c23_133] : memref<36xf32, #tpu.memory_space<smem>>
    %286 = vector.broadcast %285 : f32 to vector<16x16xf32>
    %287 = arith.mulf %284, %286 : vector<16x16xf32>
    %288 = arith.addf %282, %287 : vector<16x16xf32>
    %c3_134 = arith.constant 3 : index
    %c2_135 = arith.constant 2 : index
    %c0_136 = arith.constant 0 : index
    %289 = vector.load %arg6[%c3_134, %c2_135, %c0_136] : memref<4x18x18xf32, #tpu.memory_space<vmem>>, vector<1x16x16xf32>
    %290 = vector.shape_cast %289 : vector<1x16x16xf32> to vector<16x16xf32>
    %c27 = arith.constant 27 : index
    %291 = memref.load %arg2[%c27] : memref<36xf32, #tpu.memory_space<smem>>
    %292 = vector.broadcast %291 : f32 to vector<16x16xf32>
    %293 = arith.mulf %290, %292 : vector<16x16xf32>
    %294 = arith.addf %288, %293 : vector<16x16xf32>
    %c3_137 = arith.constant 3 : index
    %c2_138 = arith.constant 2 : index
    %c1_139 = arith.constant 1 : index
    %295 = vector.load %arg6[%c3_137, %c2_138, %c1_139] : memref<4x18x18xf32, #tpu.memory_space<vmem>>, vector<1x16x16xf32>
    %296 = vector.shape_cast %295 : vector<1x16x16xf32> to vector<16x16xf32>
    %c31 = arith.constant 31 : index
    %297 = memref.load %arg2[%c31] : memref<36xf32, #tpu.memory_space<smem>>
    %298 = vector.broadcast %297 : f32 to vector<16x16xf32>
    %299 = arith.mulf %296, %298 : vector<16x16xf32>
    %300 = arith.addf %294, %299 : vector<16x16xf32>
    %c3_140 = arith.constant 3 : index
    %c2_141 = arith.constant 2 : index
    %c2_142 = arith.constant 2 : index
    %301 = vector.load %arg6[%c3_140, %c2_141, %c2_142] : memref<4x18x18xf32, #tpu.memory_space<vmem>>, vector<1x16x16xf32>
    %302 = vector.shape_cast %301 : vector<1x16x16xf32> to vector<16x16xf32>
    %c35 = arith.constant 35 : index
    %303 = memref.load %arg2[%c35] : memref<36xf32, #tpu.memory_space<smem>>
    %304 = vector.broadcast %303 : f32 to vector<16x16xf32>
    %305 = arith.mulf %302, %304 : vector<16x16xf32>
    %306 = arith.addf %300, %305 : vector<16x16xf32>
    %c24_143 = arith.constant 24 : index
    %307 = memref.load %arg3[%c24_143] : memref<32xf32, #tpu.memory_space<smem>>
    %308 = vector.broadcast %307 : f32 to vector<16x16xf32>
    %309 = arith.mulf %306, %308 : vector<16x16xf32>
    %310 = arith.addf %225, %309 : vector<16x16xf32>
    %c25_144 = arith.constant 25 : index
    %311 = memref.load %arg3[%c25_144] : memref<32xf32, #tpu.memory_space<smem>>
    %312 = vector.broadcast %311 : f32 to vector<16x16xf32>
    %313 = arith.mulf %306, %312 : vector<16x16xf32>
    %314 = arith.addf %229, %313 : vector<16x16xf32>
    %c26_145 = arith.constant 26 : index
    %315 = memref.load %arg3[%c26_145] : memref<32xf32, #tpu.memory_space<smem>>
    %316 = vector.broadcast %315 : f32 to vector<16x16xf32>
    %317 = arith.mulf %306, %316 : vector<16x16xf32>
    %318 = arith.addf %233, %317 : vector<16x16xf32>
    %c27_146 = arith.constant 27 : index
    %319 = memref.load %arg3[%c27_146] : memref<32xf32, #tpu.memory_space<smem>>
    %320 = vector.broadcast %319 : f32 to vector<16x16xf32>
    %321 = arith.mulf %306, %320 : vector<16x16xf32>
    %322 = arith.addf %237, %321 : vector<16x16xf32>
    %c28_147 = arith.constant 28 : index
    %323 = memref.load %arg3[%c28_147] : memref<32xf32, #tpu.memory_space<smem>>
    %324 = vector.broadcast %323 : f32 to vector<16x16xf32>
    %325 = arith.mulf %306, %324 : vector<16x16xf32>
    %326 = arith.addf %241, %325 : vector<16x16xf32>
    %c29_148 = arith.constant 29 : index
    %327 = memref.load %arg3[%c29_148] : memref<32xf32, #tpu.memory_space<smem>>
    %328 = vector.broadcast %327 : f32 to vector<16x16xf32>
    %329 = arith.mulf %306, %328 : vector<16x16xf32>
    %330 = arith.addf %245, %329 : vector<16x16xf32>
    %c30_149 = arith.constant 30 : index
    %331 = memref.load %arg3[%c30_149] : memref<32xf32, #tpu.memory_space<smem>>
    %332 = vector.broadcast %331 : f32 to vector<16x16xf32>
    %333 = arith.mulf %306, %332 : vector<16x16xf32>
    %334 = arith.addf %249, %333 : vector<16x16xf32>
    %c31_150 = arith.constant 31 : index
    %335 = memref.load %arg3[%c31_150] : memref<32xf32, #tpu.memory_space<smem>>
    %336 = vector.broadcast %335 : f32 to vector<16x16xf32>
    %337 = arith.mulf %306, %336 : vector<16x16xf32>
    %338 = arith.addf %253, %337 : vector<16x16xf32>
    %c0_151 = arith.constant 0 : index
    %339 = memref.load %arg4[%c0_151] : memref<8xf32, #tpu.memory_space<smem>>
    %340 = vector.broadcast %339 : f32 to vector<16x16xf32>
    %341 = arith.addf %310, %340 : vector<16x16xf32>
    %c0_152 = arith.constant 0 : index
    %c0_153 = arith.constant 0 : index
    %c0_154 = arith.constant 0 : index
    %c0_155 = arith.constant 0 : index
    %342 = vector.load %arg5[%c0_152, %c0_153, %c0_154, %c0_155] : memref<1x8x16x16xf32, #tpu.memory_space<vmem>>, vector<1x1x16x16xf32>
    %343 = vector.shape_cast %342 : vector<1x1x16x16xf32> to vector<16x16xf32>
    %344 = vector.shape_cast %341 : vector<16x16xf32> to vector<1x1x16x16xf32>
    tpu.vector_store %arg5[%c0_152, %c0_153, %c0_154, %c0_155], %344 {strides = array<i32>} : memref<1x8x16x16xf32, #tpu.memory_space<vmem>>, vector<1x1x16x16xf32>,
    %c1_156 = arith.constant 1 : index
    %345 = memref.load %arg4[%c1_156] : memref<8xf32, #tpu.memory_space<smem>>
    %346 = vector.broadcast %345 : f32 to vector<16x16xf32>
    %347 = arith.addf %314, %346 : vector<16x16xf32>
    %c0_157 = arith.constant 0 : index
    %c1_158 = arith.constant 1 : index
    %c0_159 = arith.constant 0 : index
    %c0_160 = arith.constant 0 : index
    %348 = vector.load %arg5[%c0_157, %c1_158, %c0_159, %c0_160] : memref<1x8x16x16xf32, #tpu.memory_space<vmem>>, vector<1x1x16x16xf32>
    %349 = vector.shape_cast %348 : vector<1x1x16x16xf32> to vector<16x16xf32>
    %350 = vector.shape_cast %347 : vector<16x16xf32> to vector<1x1x16x16xf32>
    tpu.vector_store %arg5[%c0_157, %c1_158, %c0_159, %c0_160], %350 {strides = array<i32>} : memref<1x8x16x16xf32, #tpu.memory_space<vmem>>, vector<1x1x16x16xf32>,
    %c2_161 = arith.constant 2 : index
    %351 = memref.load %arg4[%c2_161] : memref<8xf32, #tpu.memory_space<smem>>
    %352 = vector.broadcast %351 : f32 to vector<16x16xf32>
    %353 = arith.addf %318, %352 : vector<16x16xf32>
    %c0_162 = arith.constant 0 : index
    %c2_163 = arith.constant 2 : index
    %c0_164 = arith.constant 0 : index
    %c0_165 = arith.constant 0 : index
    %354 = vector.load %arg5[%c0_162, %c2_163, %c0_164, %c0_165] : memref<1x8x16x16xf32, #tpu.memory_space<vmem>>, vector<1x1x16x16xf32>
    %355 = vector.shape_cast %354 : vector<1x1x16x16xf32> to vector<16x16xf32>
    %356 = vector.shape_cast %353 : vector<16x16xf32> to vector<1x1x16x16xf32>
    tpu.vector_store %arg5[%c0_162, %c2_163, %c0_164, %c0_165], %356 {strides = array<i32>} : memref<1x8x16x16xf32, #tpu.memory_space<vmem>>, vector<1x1x16x16xf32>,
    %c3_166 = arith.constant 3 : index
    %357 = memref.load %arg4[%c3_166] : memref<8xf32, #tpu.memory_space<smem>>
    %358 = vector.broadcast %357 : f32 to vector<16x16xf32>
    %359 = arith.addf %322, %358 : vector<16x16xf32>
    %c0_167 = arith.constant 0 : index
    %c3_168 = arith.constant 3 : index
    %c0_169 = arith.constant 0 : index
    %c0_170 = arith.constant 0 : index
    %360 = vector.load %arg5[%c0_167, %c3_168, %c0_169, %c0_170] : memref<1x8x16x16xf32, #tpu.memory_space<vmem>>, vector<1x1x16x16xf32>
    %361 = vector.shape_cast %360 : vector<1x1x16x16xf32> to vector<16x16xf32>
    %362 = vector.shape_cast %359 : vector<16x16xf32> to vector<1x1x16x16xf32>
    tpu.vector_store %arg5[%c0_167, %c3_168, %c0_169, %c0_170], %362 {strides = array<i32>} : memref<1x8x16x16xf32, #tpu.memory_space<vmem>>, vector<1x1x16x16xf32>,
    %c4_171 = arith.constant 4 : index
    %363 = memref.load %arg4[%c4_171] : memref<8xf32, #tpu.memory_space<smem>>
    %364 = vector.broadcast %363 : f32 to vector<16x16xf32>
    %365 = arith.addf %326, %364 : vector<16x16xf32>
    %c0_172 = arith.constant 0 : index
    %c4_173 = arith.constant 4 : index
    %c0_174 = arith.constant 0 : index
    %c0_175 = arith.constant 0 : index
    %366 = vector.load %arg5[%c0_172, %c4_173, %c0_174, %c0_175] : memref<1x8x16x16xf32, #tpu.memory_space<vmem>>, vector<1x1x16x16xf32>
    %367 = vector.shape_cast %366 : vector<1x1x16x16xf32> to vector<16x16xf32>
    %368 = vector.shape_cast %365 : vector<16x16xf32> to vector<1x1x16x16xf32>
    tpu.vector_store %arg5[%c0_172, %c4_173, %c0_174, %c0_175], %368 {strides = array<i32>} : memref<1x8x16x16xf32, #tpu.memory_space<vmem>>, vector<1x1x16x16xf32>,
    %c5_176 = arith.constant 5 : index
    %369 = memref.load %arg4[%c5_176] : memref<8xf32, #tpu.memory_space<smem>>
    %370 = vector.broadcast %369 : f32 to vector<16x16xf32>
    %371 = arith.addf %330, %370 : vector<16x16xf32>
    %c0_177 = arith.constant 0 : index
    %c5_178 = arith.constant 5 : index
    %c0_179 = arith.constant 0 : index
    %c0_180 = arith.constant 0 : index
    %372 = vector.load %arg5[%c0_177, %c5_178, %c0_179, %c0_180] : memref<1x8x16x16xf32, #tpu.memory_space<vmem>>, vector<1x1x16x16xf32>
    %373 = vector.shape_cast %372 : vector<1x1x16x16xf32> to vector<16x16xf32>
    %374 = vector.shape_cast %371 : vector<16x16xf32> to vector<1x1x16x16xf32>
    tpu.vector_store %arg5[%c0_177, %c5_178, %c0_179, %c0_180], %374 {strides = array<i32>} : memref<1x8x16x16xf32, #tpu.memory_space<vmem>>, vector<1x1x16x16xf32>,
    %c6_181 = arith.constant 6 : index
    %375 = memref.load %arg4[%c6_181] : memref<8xf32, #tpu.memory_space<smem>>
    %376 = vector.broadcast %375 : f32 to vector<16x16xf32>
    %377 = arith.addf %334, %376 : vector<16x16xf32>
    %c0_182 = arith.constant 0 : index
    %c6_183 = arith.constant 6 : index
    %c0_184 = arith.constant 0 : index
    %c0_185 = arith.constant 0 : index
    %378 = vector.load %arg5[%c0_182, %c6_183, %c0_184, %c0_185] : memref<1x8x16x16xf32, #tpu.memory_space<vmem>>, vector<1x1x16x16xf32>
    %379 = vector.shape_cast %378 : vector<1x1x16x16xf32> to vector<16x16xf32>
    %380 = vector.shape_cast %377 : vector<16x16xf32> to vector<1x1x16x16xf32>
    tpu.vector_store %arg5[%c0_182, %c6_183, %c0_184, %c0_185], %380 {strides = array<i32>} : memref<1x8x16x16xf32, #tpu.memory_space<vmem>>, vector<1x1x16x16xf32>,
    %c7_186 = arith.constant 7 : index
    %381 = memref.load %arg4[%c7_186] : memref<8xf32, #tpu.memory_space<smem>>
    %382 = vector.broadcast %381 : f32 to vector<16x16xf32>
    %383 = arith.addf %338, %382 : vector<16x16xf32>
    %c0_187 = arith.constant 0 : index
    %c7_188 = arith.constant 7 : index
    %c0_189 = arith.constant 0 : index
    %c0_190 = arith.constant 0 : index
    %384 = vector.load %arg5[%c0_187, %c7_188, %c0_189, %c0_190] : memref<1x8x16x16xf32, #tpu.memory_space<vmem>>, vector<1x1x16x16xf32>
    %385 = vector.shape_cast %384 : vector<1x1x16x16xf32> to vector<16x16xf32>
    %386 = vector.shape_cast %383 : vector<16x16xf32> to vector<1x1x16x16xf32>
    tpu.vector_store %arg5[%c0_187, %c7_188, %c0_189, %c0_190], %386 {strides = array<i32>} : memref<1x8x16x16xf32, #tpu.memory_space<vmem>>, vector<1x1x16x16xf32>,
    return
  }
  func.func @transform_0(%arg0: i32) -> (i32, i32, i32, i32) {
    %c0_i32 = arith.constant 0 : i32
    %c0_i32_0 = arith.constant 0 : i32
    %c0_i32_1 = arith.constant 0 : i32
    %c0_i32_2 = arith.constant 0 : i32
    return %arg0, %c0_i32, %c0_i32_0, %c0_i32_1 : i32, i32, i32, i32
  }
  func.func @transform_1(%arg0: i32) -> i32 {
    %c0_i32 = arith.constant 0 : i32
    %c0_i32_0 = arith.constant 0 : i32
    return %c0_i32 : i32
  }
  func.func @transform_2(%arg0: i32) -> i32 {
    %c0_i32 = arith.constant 0 : i32
    %c0_i32_0 = arith.constant 0 : i32
    return %c0_i32 : i32
  }
  func.func @transform_3(%arg0: i32) -> i32 {
    %c0_i32 = arith.constant 0 : i32
    %c0_i32_0 = arith.constant 0 : i32
    return %c0_i32 : i32
  }
  func.func @transform_4(%arg0: i32) -> (i32, i32, i32, i32) {
    %c0_i32 = arith.constant 0 : i32
    %c0_i32_0 = arith.constant 0 : i32
    %c0_i32_1 = arith.constant 0 : i32
    %c0_i32_2 = arith.constant 0 : i32
    return %arg0, %c0_i32, %c0_i32_0, %c0_i32_1 : i32, i32, i32, i32
  }
}

</mosaic_0001>

<llo_original>
// kernel: tpu_custom_call.1
$region0: #{tpu_custom_call.1}
  #allocation0 [shape = 'u32[]', space=smem, size = 0x4, offset = 0x4, fixed_abs, tag = 'smem constant byte address 0x4 - core index']
  #allocation1 [shape = 'u32[72,128]{1,0:T(1,128)}', space=vmem, size = 0x9000, scoped, tag = 'internal scratch']
  #allocation2 [shape = 'f32[4,18,18]{2,1,0:T(8,128)}', space=vmem, size = 0xc000, scoped, tag = 'scratch operand']
  %s0 = inlined_call_operand.hbm [shape: f32[2,4,16,16], index: 0, kind: input, shape index: {}]
  %s1 = inlined_call_operand.hbm [shape: f32[36], index: 1, kind: input, shape index: {}]
  %s2 = inlined_call_operand.vmem [shape: f32[32], index: 2, kind: input, shape index: {}]
  %s3 = inlined_call_operand.vmem [shape: f32[8], index: 3, kind: input, shape index: {}]
  %s4 = inlined_call_operand.hbm [shape: f32[2,8,16,16], index: 4, kind: output, shape index: {}]
  %s5 = sld [smem:[#allocation0]]
  $region65: #{tpu_custom_call.1} parent=0
    _
  %s7 = ssub.s32 1, %s5
  %s8 = scalar_select 0, %s7, %s5
  $region1: #{tpu_custom_call.1} parent=0
    #allocation3 [shape = 'u8[65536]{0}', space=vmem, size = 0x10000, scoped, tag = 'input window, operand 0']
    #allocation4 [shape = 's32[2]{0}', space=sflag, size = 0x8, scoped, tag = 'scoped memory for tpu_custom_call.1']
    #allocation5 [shape = 's32[2]{0}', space=sflag, size = 0x8, scoped, tag = 'scoped memory for tpu_custom_call.1']
    #allocation6 [shape = 's32[2]{0}', space=sflag, size = 0x8, scoped, tag = 'scoped memory for tpu_custom_call.1']
    #allocation7 [shape = 's32[2]{0}', space=sflag, size = 0x8, scoped, tag = 'scoped memory for tpu_custom_call.1']
    #allocation8 [shape = 'u8[512]{0}', space=smem, size = 0x200, scoped, tag = 'input window, operand 1, single buffered']
    #allocation9 [shape = 'u8[512]{0}', space=smem, size = 0x200, scoped, tag = 'input window, operand 2, single buffered']
    #allocation10 [shape = 'u8[512]{0}', space=smem, size = 0x200, scoped, tag = 'input window, operand 3, single buffered']
    #allocation11 [shape = 's32[1]{0}', space=sflag, size = 0x4, scoped, tag = 'scoped memory for tpu_custom_call.1']
    #allocation12 [shape = 'u8[131072]{0}', space=vmem, size = 0x20000, scoped, tag = 'output window, operand 0']
    %9 = vsyncpa [#allocation4], 0
    %s10 = scalar_lea.sflag [#allocation4], 1
    %11 = vsyncpa %s10, 0
    %12 = vsyncpa [#allocation6], 0
    %13 = vsyncpa [#allocation7], 0
    %14 = vsyncpa [#allocation11], 0
    %15 = vsyncpa [#allocation5], 0
    %s16 = scalar_lea.sflag [#allocation5], 1
    %17 = vsyncpa %s16, 0
    loop: start=0, step=1, limit=4
    $region2: #{tpu_custom_call.1} parent=1 // loop_pre_header
      _
    $region3: #{tpu_custom_call.1} parent=1 // loop_header
      %s19 = sphi 0, %s23
      %p20 = scmp.ge.s32.totalorder %s19, 4
      %s29 = sphi 0, %s31
      %s32 = sphi 0, %s29
      %s33 = sphi 0, %s32
      %s49 = sphi 0, %s33
      %s53 = sphi 0, %s53
      %s55 = sphi 0, %s53
      %s56 = sphi 0, %s55
      %s70 = sphi 0, %s56
      %s74 = sphi 0, %s74
      %s76 = sphi 0, %s74
      %s77 = sphi 0, %s76
      %s91 = sphi 0, %s77
      %s95 = sphi 0, %s95
      %s97 = sphi 0, %s95
      %s98 = sphi 0, %s97
      %s112 = sphi 0, %s98
      %s118 = sphi 0, %s120
      %s121 = sphi 0, %s118
      %s122 = sphi 0, %s121
      %s138 = sphi 0, %s122
    $region4: #{tpu_custom_call.1} parent=1 // loop_header_branch
      %22 = sbr.rel (%p20) target = $region8
    $region5: #{tpu_custom_call.1} parent=1 // loop_body
      %s24 = ssub.s32 %s19, 1
      %s25 = ssub.s32 %s19, 2
      %s26 = sadd.s32 %s19, 1
      %s27 = ssub.s32 %s19, %s26
      %p28 = scmp.eq.s32.totalorder %s27, 0
      %s30 = sadd.s32 %s29, 1
      %s31 = scalar_select %p28, %s29, %s30
      %p34 = pneg %p28
      %p35 = scmp.eq.s32.totalorder %s19, 1
      %p36 = por %p34, %p35
      %p37 = scmp.ne.s32.totalorder %s29, %s32
      %p38 = scmp.eq.s32.totalorder %s19, 0
      %p39 = por %p37, %p38
      %p40 = scmp.ne.s32.totalorder %s29, %s32
      %p41 = scmp.eq.s32.totalorder %s24, 1
      %p42 = por %p40, %p41
      %p43 = scmp.ne.s32.totalorder %s32, %s33
      %p44 = scmp.eq.s32.totalorder %s24, 0
      %p45 = por %p43, %p44
      %p46 = scmp.ne.s32.totalorder %s32, %s33
      %p47 = scmp.eq.s32.totalorder %s25, 1
      %p48 = por %p46, %p47
      %p50 = scmp.ne.s32.totalorder %s33, %s49
      %p51 = scmp.eq.s32.totalorder %s25, 0
      %p52 = por %p50, %p51
      %s54 = sadd.s32 %s53, 1
      %p57 = scmp.eq.s32.totalorder %s19, 1
      %p58 = scmp.ne.s32.totalorder %s53, %s55
      %p59 = scmp.eq.s32.totalorder %s19, 0
      %p60 = por %p58, %p59
      %p61 = scmp.ne.s32.totalorder %s53, %s55
      %p62 = scmp.eq.s32.totalorder %s24, 1
      %p63 = por %p61, %p62
      %p64 = scmp.ne.s32.totalorder %s55, %s56
      %p65 = scmp.eq.s32.totalorder %s24, 0
      %p66 = por %p64, %p65
      %p67 = scmp.ne.s32.totalorder %s55, %s56
      %p68 = scmp.eq.s32.totalorder %s25, 1
      %p69 = por %p67, %p68
      %p71 = scmp.ne.s32.totalorder %s56, %s70
      %p72 = scmp.eq.s32.totalorder %s25, 0
      %p73 = por %p71, %p72
      %s75 = sadd.s32 %s74, 1
      %p78 = scmp.eq.s32.totalorder %s19, 1
      %p79 = scmp.ne.s32.totalorder %s74, %s76
      %p80 = scmp.eq.s32.totalorder %s19, 0
      %p81 = por %p79, %p80
      %p82 = scmp.ne.s32.totalorder %s74, %s76
      %p83 = scmp.eq.s32.totalorder %s24, 1
      %p84 = por %p82, %p83
      %p85 = scmp.ne.s32.totalorder %s76, %s77
      %p86 = scmp.eq.s32.totalorder %s24, 0
      %p87 = por %p85, %p86
      %p88 = scmp.ne.s32.totalorder %s76, %s77
      %p89 = scmp.eq.s32.totalorder %s25, 1
      %p90 = por %p88, %p89
      %p92 = scmp.ne.s32.totalorder %s77, %s91
      %p93 = scmp.eq.s32.totalorder %s25, 0
      %p94 = por %p92, %p93
      %s96 = sadd.s32 %s95, 1
      %p99 = scmp.eq.s32.totalorder %s19, 1
      %p100 = scmp.ne.s32.totalorder %s95, %s97
      %p101 = scmp.eq.s32.totalorder %s19, 0
      %p102 = por %p100, %p101
      %p103 = scmp.ne.s32.totalorder %s95, %s97
      %p104 = scmp.eq.s32.totalorder %s24, 1
      %p105 = por %p103, %p104
      %p106 = scmp.ne.s32.totalorder %s97, %s98
      %p107 = scmp.eq.s32.totalorder %s24, 0
      %p108 = por %p106, %p107
      %p109 = scmp.ne.s32.totalorder %s97, %s98
      %p110 = scmp.eq.s32.totalorder %s25, 1
      %p111 = por %p109, %p110
      %p113 = scmp.ne.s32.totalorder %s98, %s112
      %p114 = scmp.eq.s32.totalorder %s25, 0
      %p115 = por %p113, %p114
      %s116 = ssub.s32 %s19, %s26
      %p117 = scmp.eq.s32.totalorder %s116, 0
      %s119 = sadd.s32 %s118, 1
      %s120 = scalar_select %p117, %s118, %s119
      %p123 = pneg %p117
      %p124 = scmp.eq.s32.totalorder %s19, 1
      %p125 = por %p123, %p124
      %p126 = scmp.ne.s32.totalorder %s118, %s121
      %p127 = scmp.eq.s32.totalorder %s19, 0
      %p128 = por %p126, %p127
      %p129 = scmp.ne.s32.totalorder %s118, %s121
      %p130 = scmp.eq.s32.totalorder %s24, 1
      %p131 = por %p129, %p130
      %p132 = scmp.ne.s32.totalorder %s121, %s122
      %p133 = scmp.eq.s32.totalorder %s24, 0
      %p134 = por %p132, %p133
      %p135 = scmp.ne.s32.totalorder %s121, %s122
      %p136 = scmp.eq.s32.totalorder %s25, 1
      %p137 = por %p135, %p136
      %p139 = scmp.ne.s32.totalorder %s122, %s138
      %p140 = scmp.eq.s32.totalorder %s25, 0
      %p141 = por %p139, %p140
      %p142 = scmp.le.s32.totalorder 1, %s19
      %p143 = scmp.lt.s32.totalorder %s19, 3
      %p144 = pnand %p142, %p143
      %p145 = pneg %p144
      // Predicated region
      $region9: #{tpu_custom_call.1} parent=5 // pred_check
        _
      $region10: #{tpu_custom_call.1} parent=5 // pred_check_branch
        %147 = sbr.rel (%p144) target = $region12
      $region11: #{tpu_custom_call.1} parent=5 // pred_region
        %s148 = ssub.s32 %s19, 1
        // Predicated region
        $region13: #{tpu_custom_call.1} parent=11 // pred_check
          %p149 = pneg %p66
        $region14: #{tpu_custom_call.1} parent=11 // pred_check_branch
          %151 = sbr.rel (%p149) target = $region16
        $region15: #{tpu_custom_call.1} parent=11 // pred_region
          %153 = vsyncadd [#allocation6], 0
          %s155 = sshll.u32 %s1, 4
          %s156 = int_to_ptr.hbm [resolvable:$true] %s155
          %158 = dma.hbm_to_smem %s156, 16, [#allocation8], [#allocation6]
        $region16: #{tpu_custom_call.1} parent=11 // pred_fallthru
          _
        // Predicated region
        $region17: #{tpu_custom_call.1} parent=11 // pred_check
          %p159 = pneg %p87
        $region18: #{tpu_custom_call.1} parent=11 // pred_check_branch
          %161 = sbr.rel (%p159) target = $region20
        $region19: #{tpu_custom_call.1} parent=11 // pred_region
          %163 = vsyncadd [#allocation7], 0
          %s165 = sshll.u32 %s2, 4
          %s166 = int_to_ptr.vmem [resolvable:$true] %s165
          %168 = dma.vmem_to_smem %s166, 16, [#allocation9], [#allocation7]
        $region20: #{tpu_custom_call.1} parent=11 // pred_fallthru
          _
        // Predicated region
        $region21: #{tpu_custom_call.1} parent=11 // pred_check
          %p169 = pneg %p108
        $region22: #{tpu_custom_call.1} parent=11 // pred_check_branch
          %171 = sbr.rel (%p169) target = $region24
        $region23: #{tpu_custom_call.1} parent=11 // pred_region
          %173 = vsyncadd [#allocation11], 0
          %s175 = sshll.u32 %s3, 4
          %s176 = int_to_ptr.vmem [resolvable:$true] %s175
          %178 = dma.vmem_to_smem %s176, 16, [#allocation10], [#allocation11]
        $region24: #{tpu_custom_call.1} parent=11 // pred_fallthru
          _
      $region12: #{tpu_custom_call.1} parent=5 // pred_fallthru
        _
      %p179 = scmp.lt.s32.totalorder %s19, 2
      // Predicated region
      $region25: #{tpu_custom_call.1} parent=5 // pred_check
        %p180 = pneg %p179
      $region26: #{tpu_custom_call.1} parent=5 // pred_check_branch
        %182 = sbr.rel (%p180) target = $region28
      $region27: #{tpu_custom_call.1} parent=5 // pred_region
        // Predicated region
        $region29: #{tpu_custom_call.1} parent=27 // pred_check
          %p183 = pneg %p39
        $region30: #{tpu_custom_call.1} parent=27 // pred_check_branch
          %185 = sbr.rel (%p183) target = $region32
        $region31: #{tpu_custom_call.1} parent=27 // pred_region
          %s186 = sand.u32 %s29, 1
          %s187 = scalar_lea.sflag [#allocation4], %s186
          %s188 = sand.u32 %s29, 1
          %s189 = smul.addr %s188, 64
          %s190 = scalar_lea.vmem [#allocation3], %s189
          %192 = vsyncadd %s187, 0
          %s193 = smul.addr %s19, 8
          %s194 = smul.addr %s193, 8
          %s195 = scalar_lea.hbm %s0, %s194
          %s196 = sshll.u32 %s195, 4
          %s197 = int_to_ptr.hbm [resolvable:$true] %s196
          %s198 = sshll.u32 %s190, 4
          %s199 = int_to_ptr.vmem [resolvable:$true] %s198
          %204 = dma.hbm_to_vmem [thread:$0]  %s197, 1024, %s199, %s187, 128, 128, 8
        $region32: #{tpu_custom_call.1} parent=27 // pred_fallthru
          _
      $region28: #{tpu_custom_call.1} parent=5 // pred_fallthru
        _
      %p205 = scmp.le.s32.totalorder 1, %s19
      %p206 = scmp.lt.s32.totalorder %s19, 3
      %p207 = pnand %p205, %p206
      %p208 = pneg %p207
      // Predicated region
      $region33: #{tpu_custom_call.1} parent=5 // pred_check
        _
      $region34: #{tpu_custom_call.1} parent=5 // pred_check_branch
        %210 = sbr.rel (%p207) target = $region36
      $region35: #{tpu_custom_call.1} parent=5 // pred_region
        %s211 = ssub.s32 %s19, 1
        %s212 = sand.u32 %s32, 1
        %s213 = scalar_lea.sflag [#allocation4], %s212
        %s214 = sand.u32 %s32, 1
        %s215 = smul.addr %s214, 64
        %s216 = scalar_lea.vmem [#allocation3], %s215
        // Predicated region
        $region37: #{tpu_custom_call.1} parent=35 // pred_check
          %p217 = pneg %p45
        $region38: #{tpu_custom_call.1} parent=35 // pred_check_branch
          %219 = sbr.rel (%p217) target = $region40
        $region39: #{tpu_custom_call.1} parent=35 // pred_region
          %221 = dma.done %s213, 1024
        $region40: #{tpu_custom_call.1} parent=35 // pred_fallthru
          _
        // Predicated region
        $region41: #{tpu_custom_call.1} parent=35 // pred_check
          %p222 = pneg %p66
        $region42: #{tpu_custom_call.1} parent=35 // pred_check_branch
          %224 = sbr.rel (%p222) target = $region44
        $region43: #{tpu_custom_call.1} parent=35 // pred_region
          %226 = dma.done [#allocation6], 16
        $region44: #{tpu_custom_call.1} parent=35 // pred_fallthru
          _
        // Predicated region
        $region45: #{tpu_custom_call.1} parent=35 // pred_check
          %p227 = pneg %p87
        $region46: #{tpu_custom_call.1} parent=35 // pred_check_branch
          %229 = sbr.rel (%p227) target = $region48
        $region47: #{tpu_custom_call.1} parent=35 // pred_region
          %231 = dma.done [#allocation7], 16
        $region48: #{tpu_custom_call.1} parent=35 // pred_fallthru
          _
        // Predicated region
        $region49: #{tpu_custom_call.1} parent=35 // pred_check
          %p232 = pneg %p108
        $region50: #{tpu_custom_call.1} parent=35 // pred_check_branch
          %234 = sbr.rel (%p232) target = $region52
        $region51: #{tpu_custom_call.1} parent=35 // pred_region
          %236 = dma.done [#allocation11], 16
        $region52: #{tpu_custom_call.1} parent=35 // pred_fallthru
          _
        %237 = sfence
        %s238 = sand.u32 %s32, 1
        %s239 = scalar_lea.sflag [#allocation4], %s238
        %s240 = sand.u32 %s32, 1
        %s241 = smul.addr %s240, 64
        %s242 = scalar_lea.vmem [#allocation3], %s241
        %p243 = pneg %p45
        %p244 = pneg %p42
        %p245 = pneg %p66
        %p246 = pneg %p63
        %p247 = pneg %p87
        %p248 = pneg %p84
        %p249 = pneg %p108
        %p250 = pneg %p105
        %p251 = pneg %p134
        %p252 = pneg %p131
        %s253 = sand.u32 %s121, 1
        %s254 = scalar_lea.sflag [#allocation5], %s253
        %s255 = sand.u32 %s121, 1
        %s256 = smul.addr %s255, 128
        %s257 = scalar_lea.vmem [#allocation12], %s256
        %vm258 = vcmask 146432
        %259 = vst.msk [vmem:[#allocation2] sm:$0xff] %vm258, 0.0
        %260 = vst.msk [vmem:[#allocation2 + $0x8] sm:$0xff] %vm258, 0.0
        %vm261 = vcmask 140288
        %262 = vst.msk [vmem:[#allocation2 + $0x10] sm:$0x3] %vm261, 0.0
        %263 = vst.msk [vmem:[#allocation2 + $0x18] sm:$0xff] %vm258, 0.0
        %264 = vst.msk [vmem:[#allocation2 + $0x20] sm:$0xff] %vm258, 0.0
        %265 = vst.msk [vmem:[#allocation2 + $0x28] sm:$0x3] %vm261, 0.0
        %266 = vst.msk [vmem:[#allocation2 + $0x30] sm:$0xff] %vm258, 0.0
        %267 = vst.msk [vmem:[#allocation2 + $0x38] sm:$0xff] %vm258, 0.0
        %268 = vst.msk [vmem:[#allocation2 + $0x40] sm:$0x3] %vm261, 0.0
        %269 = vst.msk [vmem:[#allocation2 + $0x48] sm:$0xff] %vm258, 0.0
        %270 = vst.msk [vmem:[#allocation2 + $0x50] sm:$0xff] %vm258, 0.0
        %271 = vst.msk [vmem:[#allocation2 + $0x58] sm:$0x3] %vm261, 0.0
        %v272 = vld [vmem:[%s216] sm:$0xff]
        %v273 = vld [vmem:[%s216 + $0x8] sm:$0xff]
        %v274 = vld [vmem:[%s216 + $0x10] sm:$0xff]
        %v275 = vld [vmem:[%s216 + $0x18] sm:$0xff]
        %v276 = vld [vmem:[%s216 + $0x20] sm:$0xff]
        %v277 = vld [vmem:[%s216 + $0x28] sm:$0xff]
        %v278 = vld [vmem:[%s216 + $0x30] sm:$0xff]
        %v279 = vld [vmem:[%s216 + $0x38] sm:$0xff]
        %v280 = vmax.f32 %v272, 0.0
        %v281 = vmax.f32 %v273, 0.0
        %v282 = vmax.f32 %v274, 0.0
        %v283 = vmax.f32 %v275, 0.0
        %v284 = vmax.f32 %v276, 0.0
        %v285 = vmax.f32 %v277, 0.0
        %v286 = vmax.f32 %v278, 0.0
        %v287 = vmax.f32 %v279, 0.0
        %296 = vrot.lane.b32.xlu0 %v280, 1
        %v297 = vpop.permute.xlu0 %296
        %298 = vrot.lane.b32.xlu0 %v281, 1
        %v299 = vpop.permute.xlu0 %298
        %300 = vrot.lane.b32.xlu0 %v282, 1
        %v301 = vpop.permute.xlu0 %300
        %302 = vrot.lane.b32.xlu0 %v283, 1
        %v303 = vpop.permute.xlu0 %302
        %304 = vrot.lane.b32.xlu0 %v284, 1
        %v305 = vpop.permute.xlu0 %304
        %306 = vrot.lane.b32.xlu0 %v285, 1
        %v307 = vpop.permute.xlu0 %306
        %308 = vrot.lane.b32.xlu0 %v286, 1
        %v309 = vpop.permute.xlu0 %308
        %310 = vrot.lane.b32.xlu0 %v287, 1
        %v311 = vpop.permute.xlu0 %310
        %vm320 = vcmask 138248
        %321 = vst.msk [vmem:[#allocation2 + $0x1] sm:$0xff] %vm320, %v297
        %322 = vst.msk [vmem:[#allocation2 + $0x9] sm:$0xff] %vm320, %v299
        %323 = vst.msk [vmem:[#allocation2 + $0x19] sm:$0xff] %vm320, %v301
        %324 = vst.msk [vmem:[#allocation2 + $0x21] sm:$0xff] %vm320, %v303
        %325 = vst.msk [vmem:[#allocation2 + $0x31] sm:$0xff] %vm320, %v305
        %326 = vst.msk [vmem:[#allocation2 + $0x39] sm:$0xff] %vm320, %v307
        %327 = vst.msk [vmem:[#allocation2 + $0x49] sm:$0xff] %vm320, %v309
        %328 = vst.msk [vmem:[#allocation2 + $0x51] sm:$0xff] %vm320, %v311
        %v329 = vld [vmem:[#allocation2] sm:$0xff]
        %v330 = vld [vmem:[#allocation2 + $0x8] sm:$0xff]
        %s331 = sld [smem:[#allocation8]]
        %v332 = vstv %s331
        %v333 = vmul.f32 %v329, %v332
        %v334 = vmul.f32 %v330, %v332
        %s335 = sld [smem:[#allocation8 + $0x4]]
        %v336 = vstv %s335
        %v337 = vmul.f32 %v329, %v336
        %v338 = vmul.f32 %v330, %v336
        %341 = vrot.lane.b32.xlu0 %v337, 127
        %v342 = vpop.permute.xlu0 %341
        %343 = vrot.lane.b32.xlu0 %v338, 127
        %v344 = vpop.permute.xlu0 %343
        %v347 = vadd.f32 %v333, %v342
        %v348 = vadd.f32 %v334, %v344
        %s349 = sld [smem:[#allocation8 + $0x8]]
        %v350 = vstv %s349
        %v351 = vmul.f32 %v329, %v350
        %v352 = vmul.f32 %v330, %v350
        %355 = vrot.lane.b32.xlu0 %v351, 126
        %v356 = vpop.permute.xlu0 %355
        %357 = vrot.lane.b32.xlu0 %v352, 126
        %v358 = vpop.permute.xlu0 %357
        %v361 = vadd.f32 %v347, %v356
        %v362 = vadd.f32 %v348, %v358
        %v363 = vld [vmem:[#allocation2 + $0x1] sm:$0xff]
        %v364 = vld [vmem:[#allocation2 + $0x9] sm:$0xff]
        %s365 = sld [smem:[#allocation8 + $0xc]]
        %v366 = vstv %s365
        %v367 = vmul.f32 %v363, %v366
        %v368 = vmul.f32 %v364, %v366
        %v369 = vadd.f32 %v361, %v367
        %v370 = vadd.f32 %v362, %v368
        %s371 = sld [smem:[#allocation8 + $0x10]]
        %v372 = vstv %s371
        %v373 = vmul.f32 %v363, %v372
        %v374 = vmul.f32 %v364, %v372
        %377 = vrot.lane.b32.xlu0 %v373, 127
        %v378 = vpop.permute.xlu0 %377
        %379 = vrot.lane.b32.xlu0 %v374, 127
        %v380 = vpop.permute.xlu0 %379
        %v383 = vadd.f32 %v369, %v378
        %v384 = vadd.f32 %v370, %v380
        %s385 = sld [smem:[#allocation8 + $0x14]]
        %v386 = vstv %s385
        %v387 = vmul.f32 %v363, %v386
        %v388 = vmul.f32 %v364, %v386
        %391 = vrot.lane.b32.xlu0 %v387, 126
        %v392 = vpop.permute.xlu0 %391
        %393 = vrot.lane.b32.xlu0 %v388, 126
        %v394 = vpop.permute.xlu0 %393
        %v397 = vadd.f32 %v383, %v392
        %v398 = vadd.f32 %v384, %v394
        %v399 = vld [vmem:[#allocation2 + $0x2] sm:$0xff]
        %v400 = vld [vmem:[#allocation2 + $0xa] sm:$0xff]
        %s401 = sld [smem:[#allocation8 + $0x18]]
        %v402 = vstv %s401
        %v403 = vmul.f32 %v399, %v402
        %v404 = vmul.f32 %v400, %v402
        %v405 = vadd.f32 %v397, %v403
        %v406 = vadd.f32 %v398, %v404
        %s407 = sld [smem:[#allocation8 + $0x1c]]
        %v408 = vstv %s407
        %v409 = vmul.f32 %v399, %v408
        %v410 = vmul.f32 %v400, %v408
        %413 = vrot.lane.b32.xlu0 %v409, 127
        %v414 = vpop.permute.xlu0 %413
        %415 = vrot.lane.b32.xlu0 %v410, 127
        %v416 = vpop.permute.xlu0 %415
        %v419 = vadd.f32 %v405, %v414
        %v420 = vadd.f32 %v406, %v416
        %s421 = sld [smem:[#allocation8 + $0x20]]
        %v422 = vstv %s421
        %v423 = vmul.f32 %v399, %v422
        %v424 = vmul.f32 %v400, %v422
        %427 = vrot.lane.b32.xlu0 %v423, 126
        %v428 = vpop.permute.xlu0 %427
        %429 = vrot.lane.b32.xlu0 %v424, 126
        %v430 = vpop.permute.xlu0 %429
        %v433 = vadd.f32 %v419, %v428
        %v434 = vadd.f32 %v420, %v430
        %s435 = sld [smem:[#allocation9]]
        %v436 = vstv %s435
        %v437 = vmul.f32 %v433, %v436
        %v438 = vmul.f32 %v434, %v436
        %s439 = sld [smem:[#allocation9 + $0x1]]
        %v440 = vstv %s439
        %v441 = vmul.f32 %v433, %v440
        %v442 = vmul.f32 %v434, %v440
        %s443 = sld [smem:[#allocation9 + $0x2]]
        %v444 = vstv %s443
        %v445 = vmul.f32 %v433, %v444
        %v446 = vmul.f32 %v434, %v444
        %s447 = sld [smem:[#allocation9 + $0x3]]
        %v448 = vstv %s447
        %v449 = vmul.f32 %v433, %v448
        %v450 = vmul.f32 %v434, %v448
        %s451 = sld [smem:[#allocation9 + $0x4]]
        %v452 = vstv %s451
        %v453 = vmul.f32 %v433, %v452
        %v454 = vmul.f32 %v434, %v452
        %s455 = sld [smem:[#allocation9 + $0x5]]
        %v456 = vstv %s455
        %v457 = vmul.f32 %v433, %v456
        %v458 = vmul.f32 %v434, %v456
        %s459 = sld [smem:[#allocation9 + $0x6]]
        %v460 = vstv %s459
        %v461 = vmul.f32 %v433, %v460
        %v462 = vmul.f32 %v434, %v460
        %s463 = sld [smem:[#allocation9 + $0x7]]
        %v464 = vstv %s463
        %v465 = vmul.f32 %v433, %v464
        %v466 = vmul.f32 %v434, %v464
        %s467 = scalar_lea.vmem [#allocation2], 24
        %v468 = vld [vmem:[%s467] sm:$0xff]
        %v469 = vld [vmem:[%s467 + $0x8] sm:$0xff]
        %s470 = sld [smem:[#allocation8 + $0x1]]
        %v471 = vstv %s470
        %v472 = vmul.f32 %v468, %v471
        %v473 = vmul.f32 %v469, %v471
        %s474 = sld [smem:[#allocation8 + $0x5]]
        %v475 = vstv %s474
        %v476 = vmul.f32 %v468, %v475
        %v477 = vmul.f32 %v469, %v475
        %480 = vrot.lane.b32.xlu0 %v476, 127
        %v481 = vpop.permute.xlu0 %480
        %482 = vrot.lane.b32.xlu0 %v477, 127
        %v483 = vpop.permute.xlu0 %482
        %v486 = vadd.f32 %v472, %v481
        %v487 = vadd.f32 %v473, %v483
        %s488 = sld [smem:[#allocation8 + $0x9]]
        %v489 = vstv %s488
        %v490 = vmul.f32 %v468, %v489
        %v491 = vmul.f32 %v469, %v489
        %494 = vrot.lane.b32.xlu0 %v490, 126
        %v495 = vpop.permute.xlu0 %494
        %496 = vrot.lane.b32.xlu0 %v491, 126
        %v497 = vpop.permute.xlu0 %496
        %v500 = vadd.f32 %v486, %v495
        %v501 = vadd.f32 %v487, %v497
        %v502 = vld [vmem:[%s467 + $0x1] sm:$0xff]
        %v503 = vld [vmem:[%s467 + $0x9] sm:$0xff]
        %s504 = sld [smem:[#allocation8 + $0xd]]
        %v505 = vstv %s504
        %v506 = vmul.f32 %v502, %v505
        %v507 = vmul.f32 %v503, %v505
        %v508 = vadd.f32 %v500, %v506
        %v509 = vadd.f32 %v501, %v507
        %s510 = sld [smem:[#allocation8 + $0x11]]
        %v511 = vstv %s510
        %v512 = vmul.f32 %v502, %v511
        %v513 = vmul.f32 %v503, %v511
        %516 = vrot.lane.b32.xlu0 %v512, 127
        %v517 = vpop.permute.xlu0 %516
        %518 = vrot.lane.b32.xlu0 %v513, 127
        %v519 = vpop.permute.xlu0 %518
        %v522 = vadd.f32 %v508, %v517
        %v523 = vadd.f32 %v509, %v519
        %s524 = sld [smem:[#allocation8 + $0x15]]
        %v525 = vstv %s524
        %v526 = vmul.f32 %v502, %v525
        %v527 = vmul.f32 %v503, %v525
        %530 = vrot.lane.b32.xlu0 %v526, 126
        %v531 = vpop.permute.xlu0 %530
        %532 = vrot.lane.b32.xlu0 %v527, 126
        %v533 = vpop.permute.xlu0 %532
        %v536 = vadd.f32 %v522, %v531
        %v537 = vadd.f32 %v523, %v533
        %v538 = vld [vmem:[%s467 + $0x2] sm:$0xff]
        %v539 = vld [vmem:[%s467 + $0xa] sm:$0xff]
        %s540 = sld [smem:[#allocation8 + $0x19]]
        %v541 = vstv %s540
        %v542 = vmul.f32 %v538, %v541
        %v543 = vmul.f32 %v539, %v541
        %v544 = vadd.f32 %v536, %v542
        %v545 = vadd.f32 %v537, %v543
        %s546 = sld [smem:[#allocation8 + $0x1d]]
        %v547 = vstv %s546
        %v548 = vmul.f32 %v538, %v547
        %v549 = vmul.f32 %v539, %v547
        %552 = vrot.lane.b32.xlu0 %v548, 127
        %v553 = vpop.permute.xlu0 %552
        %554 = vrot.lane.b32.xlu0 %v549, 127
        %v555 = vpop.permute.xlu0 %554
        %v558 = vadd.f32 %v544, %v553
        %v559 = vadd.f32 %v545, %v555
        %s560 = sld [smem:[#allocation8 + $0x21]]
        %v561 = vstv %s560
        %v562 = vmul.f32 %v538, %v561
        %v563 = vmul.f32 %v539, %v561
        %566 = vrot.lane.b32.xlu0 %v562, 126
        %v567 = vpop.permute.xlu0 %566
        %568 = vrot.lane.b32.xlu0 %v563, 126
        %v569 = vpop.permute.xlu0 %568
        %v572 = vadd.f32 %v558, %v567
        %v573 = vadd.f32 %v559, %v569
        %s574 = sld [smem:[#allocation9 + $0x8]]
        %v575 = vstv %s574
        %v576 = vmul.f32 %v572, %v575
        %v577 = vmul.f32 %v573, %v575
        %v578 = vadd.f32 %v437, %v576
        %v579 = vadd.f32 %v438, %v577
        %s580 = sld [smem:[#allocation9 + $0x9]]
        %v581 = vstv %s580
        %v582 = vmul.f32 %v572, %v581
        %v583 = vmul.f32 %v573, %v581
        %v584 = vadd.f32 %v441, %v582
        %v585 = vadd.f32 %v442, %v583
        %s586 = sld [smem:[#allocation9 + $0xa]]
        %v587 = vstv %s586
        %v588 = vmul.f32 %v572, %v587
        %v589 = vmul.f32 %v573, %v587
        %v590 = vadd.f32 %v445, %v588
        %v591 = vadd.f32 %v446, %v589
        %s592 = sld [smem:[#allocation9 + $0xb]]
        %v593 = vstv %s592
        %v594 = vmul.f32 %v572, %v593
        %v595 = vmul.f32 %v573, %v593
        %v596 = vadd.f32 %v449, %v594
        %v597 = vadd.f32 %v450, %v595
        %s598 = sld [smem:[#allocation9 + $0xc]]
        %v599 = vstv %s598
        %v600 = vmul.f32 %v572, %v599
        %v601 = vmul.f32 %v573, %v599
        %v602 = vadd.f32 %v453, %v600
        %v603 = vadd.f32 %v454, %v601
        %s604 = sld [smem:[#allocation9 + $0xd]]
        %v605 = vstv %s604
        %v606 = vmul.f32 %v572, %v605
        %v607 = vmul.f32 %v573, %v605
        %v608 = vadd.f32 %v457, %v606
        %v609 = vadd.f32 %v458, %v607
        %s610 = sld [smem:[#allocation9 + $0xe]]
        %v611 = vstv %s610
        %v612 = vmul.f32 %v572, %v611
        %v613 = vmul.f32 %v573, %v611
        %v614 = vadd.f32 %v461, %v612
        %v615 = vadd.f32 %v462, %v613
        %s616 = sld [smem:[#allocation9 + $0xf]]
        %v617 = vstv %s616
        %v618 = vmul.f32 %v572, %v617
        %v619 = vmul.f32 %v573, %v617
        %v620 = vadd.f32 %v465, %v618
        %v621 = vadd.f32 %v466, %v619
        %s622 = scalar_lea.vmem [#allocation2], 48
        %v623 = vld [vmem:[%s622] sm:$0xff]
        %v624 = vld [vmem:[%s622 + $0x8] sm:$0xff]
        %s625 = sld [smem:[#allocation8 + $0x2]]
        %v626 = vstv %s625
        %v627 = vmul.f32 %v623, %v626
        %v628 = vmul.f32 %v624, %v626
        %s629 = sld [smem:[#allocation8 + $0x6]]
        %v630 = vstv %s629
        %v631 = vmul.f32 %v623, %v630
        %v632 = vmul.f32 %v624, %v630
        %635 = vrot.lane.b32.xlu0 %v631, 127
        %v636 = vpop.permute.xlu0 %635
        %637 = vrot.lane.b32.xlu0 %v632, 127
        %v638 = vpop.permute.xlu0 %637
        %v641 = vadd.f32 %v627, %v636
        %v642 = vadd.f32 %v628, %v638
        %s643 = sld [smem:[#allocation8 + $0xa]]
        %v644 = vstv %s643
        %v645 = vmul.f32 %v623, %v644
        %v646 = vmul.f32 %v624, %v644
        %649 = vrot.lane.b32.xlu0 %v645, 126
        %v650 = vpop.permute.xlu0 %649
        %651 = vrot.lane.b32.xlu0 %v646, 126
        %v652 = vpop.permute.xlu0 %651
        %v655 = vadd.f32 %v641, %v650
        %v656 = vadd.f32 %v642, %v652
        %v657 = vld [vmem:[%s622 + $0x1] sm:$0xff]
        %v658 = vld [vmem:[%s622 + $0x9] sm:$0xff]
        %s659 = sld [smem:[#allocation8 + $0xe]]
        %v660 = vstv %s659
        %v661 = vmul.f32 %v657, %v660
        %v662 = vmul.f32 %v658, %v660
        %v663 = vadd.f32 %v655, %v661
        %v664 = vadd.f32 %v656, %v662
        %s665 = sld [smem:[#allocation8 + $0x12]]
        %v666 = vstv %s665
        %v667 = vmul.f32 %v657, %v666
        %v668 = vmul.f32 %v658, %v666
        %671 = vrot.lane.b32.xlu0 %v667, 127
        %v672 = vpop.permute.xlu0 %671
        %673 = vrot.lane.b32.xlu0 %v668, 127
        %v674 = vpop.permute.xlu0 %673
        %v677 = vadd.f32 %v663, %v672
        %v678 = vadd.f32 %v664, %v674
        %s679 = sld [smem:[#allocation8 + $0x16]]
        %v680 = vstv %s679
        %v681 = vmul.f32 %v657, %v680
        %v682 = vmul.f32 %v658, %v680
        %685 = vrot.lane.b32.xlu0 %v681, 126
        %v686 = vpop.permute.xlu0 %685
        %687 = vrot.lane.b32.xlu0 %v682, 126
        %v688 = vpop.permute.xlu0 %687
        %v691 = vadd.f32 %v677, %v686
        %v692 = vadd.f32 %v678, %v688
        %v693 = vld [vmem:[%s622 + $0x2] sm:$0xff]
        %v694 = vld [vmem:[%s622 + $0xa] sm:$0xff]
        %s695 = sld [smem:[#allocation8 + $0x1a]]
        %v696 = vstv %s695
        %v697 = vmul.f32 %v693, %v696
        %v698 = vmul.f32 %v694, %v696
        %v699 = vadd.f32 %v691, %v697
        %v700 = vadd.f32 %v692, %v698
        %s701 = sld [smem:[#allocation8 + $0x1e]]
        %v702 = vstv %s701
        %v703 = vmul.f32 %v693, %v702
        %v704 = vmul.f32 %v694, %v702
        %707 = vrot.lane.b32.xlu0 %v703, 127
        %v708 = vpop.permute.xlu0 %707
        %709 = vrot.lane.b32.xlu0 %v704, 127
        %v710 = vpop.permute.xlu0 %709
        %v713 = vadd.f32 %v699, %v708
        %v714 = vadd.f32 %v700, %v710
        %s715 = sld [smem:[#allocation8 + $0x22]]
        %v716 = vstv %s715
        %v717 = vmul.f32 %v693, %v716
        %v718 = vmul.f32 %v694, %v716
        %721 = vrot.lane.b32.xlu0 %v717, 126
        %v722 = vpop.permute.xlu0 %721
        %723 = vrot.lane.b32.xlu0 %v718, 126
        %v724 = vpop.permute.xlu0 %723
        %v727 = vadd.f32 %v713, %v722
        %v728 = vadd.f32 %v714, %v724
        %s729 = sld [smem:[#allocation9 + $0x10]]
        %v730 = vstv %s729
        %v731 = vmul.f32 %v727, %v730
        %v732 = vmul.f32 %v728, %v730
        %v733 = vadd.f32 %v578, %v731
        %v734 = vadd.f32 %v579, %v732
        %s735 = sld [smem:[#allocation9 + $0x11]]
        %v736 = vstv %s735
        %v737 = vmul.f32 %v727, %v736
        %v738 = vmul.f32 %v728, %v736
        %v739 = vadd.f32 %v584, %v737
        %v740 = vadd.f32 %v585, %v738
        %s741 = sld [smem:[#allocation9 + $0x12]]
        %v742 = vstv %s741
        %v743 = vmul.f32 %v727, %v742
        %v744 = vmul.f32 %v728, %v742
        %v745 = vadd.f32 %v590, %v743
        %v746 = vadd.f32 %v591, %v744
        %s747 = sld [smem:[#allocation9 + $0x13]]
        %v748 = vstv %s747
        %v749 = vmul.f32 %v727, %v748
        %v750 = vmul.f32 %v728, %v748
        %v751 = vadd.f32 %v596, %v749
        %v752 = vadd.f32 %v597, %v750
        %s753 = sld [smem:[#allocation9 + $0x14]]
        %v754 = vstv %s753
        %v755 = vmul.f32 %v727, %v754
        %v756 = vmul.f32 %v728, %v754
        %v757 = vadd.f32 %v602, %v755
        %v758 = vadd.f32 %v603, %v756
        %s759 = sld [smem:[#allocation9 + $0x15]]
        %v760 = vstv %s759
        %v761 = vmul.f32 %v727, %v760
        %v762 = vmul.f32 %v728, %v760
        %v763 = vadd.f32 %v608, %v761
        %v764 = vadd.f32 %v609, %v762
        %s765 = sld [smem:[#allocation9 + $0x16]]
        %v766 = vstv %s765
        %v767 = vmul.f32 %v727, %v766
        %v768 = vmul.f32 %v728, %v766
        %v769 = vadd.f32 %v614, %v767
        %v770 = vadd.f32 %v615, %v768
        %s771 = sld [smem:[#allocation9 + $0x17]]
        %v772 = vstv %s771
        %v773 = vmul.f32 %v727, %v772
        %v774 = vmul.f32 %v728, %v772
        %v775 = vadd.f32 %v620, %v773
        %v776 = vadd.f32 %v621, %v774
        %s777 = scalar_lea.vmem [#allocation2], 72
        %v778 = vld [vmem:[%s777] sm:$0xff]
        %v779 = vld [vmem:[%s777 + $0x8] sm:$0xff]
        %s780 = sld [smem:[#allocation8 + $0x3]]
        %v781 = vstv %s780
        %v782 = vmul.f32 %v778, %v781
        %v783 = vmul.f32 %v779, %v781
        %s784 = sld [smem:[#allocation8 + $0x7]]
        %v785 = vstv %s784
        %v786 = vmul.f32 %v778, %v785
        %v787 = vmul.f32 %v779, %v785
        %790 = vrot.lane.b32.xlu0 %v786, 127
        %v791 = vpop.permute.xlu0 %790
        %792 = vrot.lane.b32.xlu0 %v787, 127
        %v793 = vpop.permute.xlu0 %792
        %v796 = vadd.f32 %v782, %v791
        %v797 = vadd.f32 %v783, %v793
        %s798 = sld [smem:[#allocation8 + $0xb]]
        %v799 = vstv %s798
        %v800 = vmul.f32 %v778, %v799
        %v801 = vmul.f32 %v779, %v799
        %804 = vrot.lane.b32.xlu0 %v800, 126
        %v805 = vpop.permute.xlu0 %804
        %806 = vrot.lane.b32.xlu0 %v801, 126
        %v807 = vpop.permute.xlu0 %806
        %v810 = vadd.f32 %v796, %v805
        %v811 = vadd.f32 %v797, %v807
        %v812 = vld [vmem:[%s777 + $0x1] sm:$0xff]
        %v813 = vld [vmem:[%s777 + $0x9] sm:$0xff]
        %s814 = sld [smem:[#allocation8 + $0xf]]
        %v815 = vstv %s814
        %v816 = vmul.f32 %v812, %v815
        %v817 = vmul.f32 %v813, %v815
        %v818 = vadd.f32 %v810, %v816
        %v819 = vadd.f32 %v811, %v817
        %s820 = sld [smem:[#allocation8 + $0x13]]
        %v821 = vstv %s820
        %v822 = vmul.f32 %v812, %v821
        %v823 = vmul.f32 %v813, %v821
        %826 = vrot.lane.b32.xlu0 %v822, 127
        %v827 = vpop.permute.xlu0 %826
        %828 = vrot.lane.b32.xlu0 %v823, 127
        %v829 = vpop.permute.xlu0 %828
        %v832 = vadd.f32 %v818, %v827
        %v833 = vadd.f32 %v819, %v829
        %s834 = sld [smem:[#allocation8 + $0x17]]
        %v835 = vstv %s834
        %v836 = vmul.f32 %v812, %v835
        %v837 = vmul.f32 %v813, %v835
        %840 = vrot.lane.b32.xlu0 %v836, 126
        %v841 = vpop.permute.xlu0 %840
        %842 = vrot.lane.b32.xlu0 %v837, 126
        %v843 = vpop.permute.xlu0 %842
        %v846 = vadd.f32 %v832, %v841
        %v847 = vadd.f32 %v833, %v843
        %v848 = vld [vmem:[%s777 + $0x2] sm:$0xff]
        %v849 = vld [vmem:[%s777 + $0xa] sm:$0xff]
        %s850 = sld [smem:[#allocation8 + $0x1b]]
        %v851 = vstv %s850
        %v852 = vmul.f32 %v848, %v851
        %v853 = vmul.f32 %v849, %v851
        %v854 = vadd.f32 %v846, %v852
        %v855 = vadd.f32 %v847, %v853
        %s856 = sld [smem:[#allocation8 + $0x1f]]
        %v857 = vstv %s856
        %v858 = vmul.f32 %v848, %v857
        %v859 = vmul.f32 %v849, %v857
        %862 = vrot.lane.b32.xlu0 %v858, 127
        %v863 = vpop.permute.xlu0 %862
        %864 = vrot.lane.b32.xlu0 %v859, 127
        %v865 = vpop.permute.xlu0 %864
        %v868 = vadd.f32 %v854, %v863
        %v869 = vadd.f32 %v855, %v865
        %s870 = sld [smem:[#allocation8 + $0x23]]
        %v871 = vstv %s870
        %v872 = vmul.f32 %v848, %v871
        %v873 = vmul.f32 %v849, %v871
        %876 = vrot.lane.b32.xlu0 %v872, 126
        %v877 = vpop.permute.xlu0 %876
        %878 = vrot.lane.b32.xlu0 %v873, 126
        %v879 = vpop.permute.xlu0 %878
        %v882 = vadd.f32 %v868, %v877
        %v883 = vadd.f32 %v869, %v879
        %s884 = sld [smem:[#allocation9 + $0x18]]
        %v885 = vstv %s884
        %v886 = vmul.f32 %v882, %v885
        %v887 = vmul.f32 %v883, %v885
        %v888 = vadd.f32 %v733, %v886
        %v889 = vadd.f32 %v734, %v887
        %s890 = sld [smem:[#allocation9 + $0x19]]
        %v891 = vstv %s890
        %v892 = vmul.f32 %v882, %v891
        %v893 = vmul.f32 %v883, %v891
        %v894 = vadd.f32 %v739, %v892
        %v895 = vadd.f32 %v740, %v893
        %s896 = sld [smem:[#allocation9 + $0x1a]]
        %v897 = vstv %s896
        %v898 = vmul.f32 %v882, %v897
        %v899 = vmul.f32 %v883, %v897
        %v900 = vadd.f32 %v745, %v898
        %v901 = vadd.f32 %v746, %v899
        %s902 = sld [smem:[#allocation9 + $0x1b]]
        %v903 = vstv %s902
        %v904 = vmul.f32 %v882, %v903
        %v905 = vmul.f32 %v883, %v903
        %v906 = vadd.f32 %v751, %v904
        %v907 = vadd.f32 %v752, %v905
        %s908 = sld [smem:[#allocation9 + $0x1c]]
        %v909 = vstv %s908
        %v910 = vmul.f32 %v882, %v909
        %v911 = vmul.f32 %v883, %v909
        %v912 = vadd.f32 %v757, %v910
        %v913 = vadd.f32 %v758, %v911
        %s914 = sld [smem:[#allocation9 + $0x1d]]
        %v915 = vstv %s914
        %v916 = vmul.f32 %v882, %v915
        %v917 = vmul.f32 %v883, %v915
        %v918 = vadd.f32 %v763, %v916
        %v919 = vadd.f32 %v764, %v917
        %s920 = sld [smem:[#allocation9 + $0x1e]]
        %v921 = vstv %s920
        %v922 = vmul.f32 %v882, %v921
        %v923 = vmul.f32 %v883, %v921
        %v924 = vadd.f32 %v769, %v922
        %v925 = vadd.f32 %v770, %v923
        %s926 = sld [smem:[#allocation9 + $0x1f]]
        %v927 = vstv %s926
        %v928 = vmul.f32 %v882, %v927
        %v929 = vmul.f32 %v883, %v927
        %v930 = vadd.f32 %v775, %v928
        %v931 = vadd.f32 %v776, %v929
        %s932 = sld [smem:[#allocation10]]
        %v933 = vstv %s932
        %v934 = vadd.f32 %v888, %v933
        %v935 = vadd.f32 %v889, %v933
        %vm936 = vcmask 130048
        %937 = vst.msk [vmem:[%s257] sm:$0xff] %vm936, %v934
        %938 = vst.msk [vmem:[%s257 + $0x8] sm:$0xff] %vm936, %v935
        %s939 = sld [smem:[#allocation10 + $0x1]]
        %v940 = vstv %s939
        %v941 = vadd.f32 %v894, %v940
        %v942 = vadd.f32 %v895, %v940
        %s943 = scalar_lea.vmem %s257, 16 [#allocation12]
        %944 = vst.msk [vmem:[%s943] sm:$0xff] %vm936, %v941
        %945 = vst.msk [vmem:[%s943 + $0x8] sm:$0xff] %vm936, %v942
        %s946 = sld [smem:[#allocation10 + $0x2]]
        %v947 = vstv %s946
        %v948 = vadd.f32 %v900, %v947
        %v949 = vadd.f32 %v901, %v947
        %s950 = scalar_lea.vmem %s257, 32 [#allocation12]
        %951 = vst.msk [vmem:[%s950] sm:$0xff] %vm936, %v948
        %952 = vst.msk [vmem:[%s950 + $0x8] sm:$0xff] %vm936, %v949
        %s953 = sld [smem:[#allocation10 + $0x3]]
        %v954 = vstv %s953
        %v955 = vadd.f32 %v906, %v954
        %v956 = vadd.f32 %v907, %v954
        %s957 = scalar_lea.vmem %s257, 48 [#allocation12]
        %958 = vst.msk [vmem:[%s957] sm:$0xff] %vm936, %v955
        %959 = vst.msk [vmem:[%s957 + $0x8] sm:$0xff] %vm936, %v956
        %s960 = sld [smem:[#allocation10 + $0x4]]
        %v961 = vstv %s960
        %v962 = vadd.f32 %v912, %v961
        %v963 = vadd.f32 %v913, %v961
        %s964 = scalar_lea.vmem %s257, 64 [#allocation12]
        %965 = vst.msk [vmem:[%s964] sm:$0xff] %vm936, %v962
        %966 = vst.msk [vmem:[%s964 + $0x8] sm:$0xff] %vm936, %v963
        %s967 = sld [smem:[#allocation10 + $0x5]]
        %v968 = vstv %s967
        %v969 = vadd.f32 %v918, %v968
        %v970 = vadd.f32 %v919, %v968
        %s971 = scalar_lea.vmem %s257, 80 [#allocation12]
        %972 = vst.msk [vmem:[%s971] sm:$0xff] %vm936, %v969
        %973 = vst.msk [vmem:[%s971 + $0x8] sm:$0xff] %vm936, %v970
        %s974 = sld [smem:[#allocation10 + $0x6]]
        %v975 = vstv %s974
        %v976 = vadd.f32 %v924, %v975
        %v977 = vadd.f32 %v925, %v975
        %s978 = scalar_lea.vmem %s257, 96 [#allocation12]
        %979 = vst.msk [vmem:[%s978] sm:$0xff] %vm936, %v976
        %980 = vst.msk [vmem:[%s978 + $0x8] sm:$0xff] %vm936, %v977
        %s981 = sld [smem:[#allocation10 + $0x7]]
        %v982 = vstv %s981
        %v983 = vadd.f32 %v930, %v982
        %v984 = vadd.f32 %v931, %v982
        %s985 = scalar_lea.vmem %s257, 112 [#allocation12]
        %986 = vst.msk [vmem:[%s985] sm:$0xff] %vm936, %v983
        %987 = vst.msk [vmem:[%s985 + $0x8] sm:$0xff] %vm936, %v984
        %s988 = sand.u32 %s121, 1
        %s989 = scalar_lea.sflag [#allocation5], %s988
        %s990 = sand.u32 %s121, 1
        %s991 = smul.addr %s990, 128
        %s992 = scalar_lea.vmem [#allocation12], %s991
        // Predicated region
        $region53: #{tpu_custom_call.1} parent=35 // pred_check
          %p993 = pneg %p131
        $region54: #{tpu_custom_call.1} parent=35 // pred_check_branch
          %995 = sbr.rel (%p993) target = $region56
        $region55: #{tpu_custom_call.1} parent=35 // pred_region
          %997 = vsyncadd %s989, 0
          %s998 = smul.addr %s24, 16
          %s999 = smul.addr %s998, 8
          %s1000 = scalar_lea.hbm %s4, %s999
          %s1001 = sshll.u32 %s992, 4
          %s1002 = int_to_ptr.vmem [resolvable:$true] %s1001
          %s1003 = sshll.u32 %s1000, 4
          %s1004 = int_to_ptr.hbm [resolvable:$true] %s1003
          %1009 = dma.vmem_to_hbm [thread:$0]  %s1002, 2048, %s1004, %s989, 128, 128, 8
        $region56: #{tpu_custom_call.1} parent=35 // pred_fallthru
          _
      $region36: #{tpu_custom_call.1} parent=5 // pred_fallthru
        _
      %p1010 = scmp.le.s32.totalorder 2, %s19
      // Predicated region
      $region57: #{tpu_custom_call.1} parent=5 // pred_check
        %p1011 = pneg %p1010
      $region58: #{tpu_custom_call.1} parent=5 // pred_check_branch
        %1013 = sbr.rel (%p1011) target = $region60
      $region59: #{tpu_custom_call.1} parent=5 // pred_region
        %s1014 = ssub.s32 %s19, 2
        // Predicated region
        $region61: #{tpu_custom_call.1} parent=59 // pred_check
          %p1015 = pneg %p137
        $region62: #{tpu_custom_call.1} parent=59 // pred_check_branch
          %1017 = sbr.rel (%p1015) target = $region64
        $region63: #{tpu_custom_call.1} parent=59 // pred_region
          %s1018 = sand.u32 %s122, 1
          %s1019 = scalar_lea.sflag [#allocation5], %s1018
          %s1020 = sand.u32 %s122, 1
          %s1021 = smul.addr %s1020, 128
          %s1022 = scalar_lea.vmem [#allocation12], %s1021
          %1024 = dma.done %s1019, 2048
        $region64: #{tpu_custom_call.1} parent=59 // pred_fallthru
          _
      $region60: #{tpu_custom_call.1} parent=5 // pred_fallthru
        _
    $region6: #{tpu_custom_call.1} parent=1 // loop_footer
      %s23 = sadd.s32 1, %s19
    $region7: #{tpu_custom_call.1} parent=1 // loop_footer_branch
      %18 = sbr.rel target = $region3
    $region8: #{tpu_custom_call.1} parent=1 // loop_exit
      _
    %1025 = vsyncpa [#allocation4], 1
    %s1026 = scalar_lea.sflag [#allocation4], 1
    %1027 = vsyncpa %s1026, 1
    %1028 = vsyncpa [#allocation5], 1
    %s1029 = scalar_lea.sflag [#allocation5], 1
    %1030 = vsyncpa %s1029, 1
    %1031 = vsyncpa [#allocation6], 1
    %s1032 = scalar_lea.sflag [#allocation6], 1
    %1033 = vsyncpa %s1032, 1
    %1034 = vsyncpa [#allocation7], 1
    %s1035 = scalar_lea.sflag [#allocation7], 1
    %1036 = vsyncpa %s1035, 1
    %1037 = vsyncpa [#allocation11], 1

</llo_original>
